<compile_context>
chip_gen: v5e
topology: v5e:2x2
jax: 0.10.0
libtpu: 0.0.40
codegen_flags: <defaults>
</compile_context>

<pallas_src>
import math

import jax
import jax.numpy as jnp
import numpy as np
from jax.experimental import pallas as pl
from jax.experimental.pallas import tpu as pltpu

# ----------------------------- config ---------------------------------------
IN_DIM = 16      # config.in_dim
HID_DIM = 32     # config.hid_dim
T = 4            # config.T
BETA = 0.01      # config.beta
BATCH = 256      # rows processed per call

NS = T - 1                       # number of per-step MLPs (3)
R_HID = NS * HID_DIM + 2 * HID_DIM   # 96 + 64 = 160 combined hidden rows
R_OUT = 2 * NS * IN_DIM + IN_DIM     # 96 + 16 = 112 combined head rows

LOG_2PI = math.log(2.0 * math.pi)
LEAKY_SLOPE = 0.01  # nn.LeakyReLU default

SQRT_1MB = math.sqrt(1.0 - BETA)
SQRT_B = math.sqrt(BETA)
# log N(z | sqrt(1-beta) z, sqrt(beta)) == -C1 * z^2 - C2   (per element)
C1 = (1.0 - SQRT_1MB) ** 2 / (2.0 * BETA)
C2 = math.log(SQRT_B) + 0.5 * LOG_2PI


def _leaky_relu(x):
    return jnp.where(x >= 0, x, LEAKY_SLOPE * x)


def _normal_logprob(value, mu, sigma):
    # matches torch.distributions.Normal.log_prob (used by the reference)
    var = sigma * sigma
    return -((value - mu) ** 2) / (2.0 * var) - jnp.log(sigma) - 0.5 * LOG_2PI


# ----------------------------- kernel ---------------------------------------
def ddpm_kernel(x_ref, eps_ref, w1_ref, w2_ref, w3_ref, w4_ref, b_ref, out_ref):
    f32 = jnp.float32
    bf16 = jnp.bfloat16
    n = x_ref.shape[1]                         # CHUNK (lanes, static)

    sqrt_1mb = f32(SQRT_1MB)
    sqrt_b = f32(SQRT_B)
    c1 = f32(C1)
    c2 = f32(C2)
    half_log2pi = f32(0.5 * LOG_2PI)

    x = x_ref[...]                             # (16, n) f32, batch on lanes

    # ---- Part 1: forward diffusion (reparameterized sampling) ----
    zs = []
    prev = x
    for step in range(T):
        prev = sqrt_1mb * prev + sqrt_b * eps_ref[step]
        zs.append(prev)

    # z_in rows [i*16:(i+1)*16] = zs[i]        # (64, n)
    z_in = jnp.concatenate(zs, axis=0)

    # ---- Part 2: all 4 MLPs as one block-diagonal matmul per layer ----
    b_all = b_ref[...]                         # (592, 1) f32 bias column

    def lin(w_ref_, h, b_lo, b_hi):
        acc = jnp.dot(w_ref_[...], h.astype(bf16),
                      preferred_element_type=f32)
        return acc + b_all[b_lo:b_hi, :]       # lane-broadcast bias add

    h = _leaky_relu(lin(w1_ref, z_in, 0, 160))        # (160, n)
    h = _leaky_relu(lin(w2_ref, h, 160, 320))         # (160, n)
    h = _leaky_relu(lin(w3_ref, h, 320, 480))         # (160, n)
    out4 = lin(w4_ref, h, 480, 480 + R_OUT)           # (112, n)

    # head row layout (set at pack time):
    #   rows  0:48  = mu_i   (i = 0..2, paired with zs[i])
    #   rows 48:96  = lv_i
    #   rows 96:112 = mu_x head (tanh)
    mu_all = out4[0:48, :]
    lv_all = out4[48:96, :]
    mu_x = jnp.tanh(out4[96:112, :])                  # (16, n)

    # ---- Part 3: loss (partial sums over this chunk; wrapper divides) ----
    re_sum = -0.5 * jnp.sum((x - mu_x) ** 2) - f32(n * IN_DIM) * half_log2pi

    z_kl = z_in[0:48, :]                              # zs[0..2], row-aligned with mu_all
    lp2_sum = -c1 * jnp.sum(z_kl * z_kl) - f32(NS * n * IN_DIM) * c2
    lp1_sum = (jnp.sum(-0.5 * (z_kl - mu_all) ** 2 * jnp.exp(-lv_all)
                       - 0.5 * lv_all)
               - f32(NS * n * IN_DIM) * half_log2pi)

    z_last = z_in[48:64, :]                           # zs[T-1]
    zl_sq = jnp.sum(z_last * z_last)
    lp2f_sum = -c1 * zl_sq - f32(n * IN_DIM) * c2
    lp1f_sum = -0.5 * zl_sq - f32(n * IN_DIM) * half_log2pi

    kl_sum = (lp2_sum - lp1_sum) + (lp2f_sum - lp1f_sum)
    elbo_sum = re_sum - kl_sum

    # one lane-dense (8,128) tile per chunk: row 0 = elbo partial, row 1 = RE
    row = jax.lax.broadcasted_iota(jnp.int32, out_ref.shape, 0)
    out_ref[...] = jnp.where(row == 0, elbo_sum,
                             jnp.where(row == 1, re_sum, f32(0.0))).astype(f32)


# ----------------------------- param packing ---------------------------------
def pack_params(params):
    """Pack the 16 raw parameter arrays into 4 block-diagonal bf16 weight slabs
    (transposed, out x in) plus one f32 bias column."""
    (w1, b1, w2, b2, w3, b3, w4, b4,
     wf1, bf1, wf2, bf2, wf3, bf3, wf4, bf4) = params
    f32 = jnp.float32
    bf16 = jnp.bfloat16
    H, D = HID_DIM, IN_DIM

    # ---- layer 1: (160, 64). step-MLP i reads zs[T-1-i] (z_in rows (T-1-i)*D) ----
    W1 = jnp.zeros((R_HID, T * D), f32)
    B1 = jnp.zeros((R_HID, 1), f32)
    for i in range(NS):
        W1 = W1.at[i * H:(i + 1) * H, (T - 1 - i) * D:(T - i) * D].set(w1[i].T)
        B1 = B1.at[i * H:(i + 1) * H, 0].set(b1[i][0])
    W1 = W1.at[NS * H:R_HID, 0:D].set(wf1.T)          # final MLP reads zs[0]
    B1 = B1.at[NS * H:R_HID, 0].set(bf1[0])

    # ---- layers 2 & 3: (160, 160) block-diagonal ----
    def mid(ws, bs, wf, bf):
        W = jnp.zeros((R_HID, R_HID), f32)
        B = jnp.zeros((R_HID, 1), f32)
        for i in range(NS):
            W = W.at[i * H:(i + 1) * H, i * H:(i + 1) * H].set(ws[i].T)
            B = B.at[i * H:(i + 1) * H, 0].set(bs[i][0])
        W = W.at[NS * H:R_HID, NS * H:R_HID].set(wf.T)
        B = B.at[NS * H:R_HID, 0].set(bf[0])
        return W, B

    W2, B2 = mid(w2, b2, wf2, bf2)
    W3, B3 = mid(w3, b3, wf3, bf3)

    # ---- layer 4: (112, 160); rows 0:48 mu, 48:96 lv, 96:112 mu_x head ----
    W4 = jnp.zeros((R_OUT, R_HID), f32)
    B4 = jnp.zeros((R_OUT, 1), f32)
    for i in range(NS):
        W4 = W4.at[i * D:(i + 1) * D, i * H:(i + 1) * H].set(w4[i][:, :D].T)
        W4 = W4.at[NS * D + i * D:NS * D + (i + 1) * D,
                   i * H:(i + 1) * H].set(w4[i][:, D:].T)
        B4 = B4.at[i * D:(i + 1) * D, 0].set(b4[i][0, :D])
        B4 = B4.at[NS * D + i * D:NS * D + (i + 1) * D, 0].set(b4[i][0, D:])
    W4 = W4.at[2 * NS * D:R_OUT, NS * H:R_HID].set(wf4.T)
    B4 = B4.at[2 * NS * D:R_OUT, 0].set(bf4[0])

    b_all = jnp.concatenate([B1, B2, B3, B4], axis=0)  # (592, 1) f32
    return (W1.astype(bf16), W2.astype(bf16),
            W3.astype(bf16), W4.astype(bf16), b_all)


# ----------------------------- wrapper ---------------------------------------
def _num_grid_chunks(batch):
    # 2-way parallel grid only where there are 2 TensorCores per chip (v7x);
    # on 1-TC chips (v5e/v6e) a second grid step is pure per-step overhead.
    try:
        kind = jax.devices()[0].device_kind.lower()
    except Exception:
        kind = ""
    two_tc = ("v7" in kind) or ("7x" in kind)
    if two_tc and batch % 256 == 0:
        return 2
    return 1


def ddpm_forward(x, eps, params):
    batch = x.shape[0]
    assert batch % 128 == 0
    g = _num_grid_chunks(batch)
    chunk = batch // g

    w1, w2, w3, w4, b_all = pack_params(params)

    # layout plumbing: batch on the lane axis
    xt = x.T                               # (IN_DIM, batch)
    epst = jnp.transpose(eps, (0, 2, 1))   # (T, IN_DIM, batch)

    tiles = pl.pallas_call(
        ddpm_kernel,
        out_shape=jax.ShapeDtypeStruct((g * 8, 128), jnp.float32),
        grid=(g,),
        in_specs=[
            pl.BlockSpec((IN_DIM, chunk), lambda i: (0, i)),        # x^T
            pl.BlockSpec((T, IN_DIM, chunk), lambda i: (0, 0, i)),  # eps^T
            pl.BlockSpec(tuple(w1.shape), lambda i: (0, 0)),        # W1 slab
            pl.BlockSpec(tuple(w2.shape), lambda i: (0, 0)),        # W2 slab
            pl.BlockSpec(tuple(w3.shape), lambda i: (0, 0)),        # W3 slab
            pl.BlockSpec(tuple(w4.shape), lambda i: (0, 0)),        # W4 slab
            pl.BlockSpec(tuple(b_all.shape), lambda i: (0, 0)),     # bias column
        ],
        out_specs=pl.BlockSpec((8, 128), lambda i: (i, 0)),
        compiler_params=pltpu.CompilerParams(
            dimension_semantics=("parallel",)),
    )(xt, epst, w1, w2, w3, w4, b_all)

    t = tiles.reshape(g, 8, 128)
    elbo_sum = jnp.sum(t[:, 0, 0])
    re_sum = jnp.sum(t[:, 1, 0])
    loss = -elbo_sum / batch
    neg_re = -re_sum / batch
    return loss, neg_re


# ----------------------------- plain-JAX reference ---------------------------
def ddpm_reference(x, eps, params):
    (w1, b1, w2, b2, w3, b3, w4, b4,
     wf1, bf1, wf2, bf2, wf3, bf3, wf4, bf4) = params
    sqrt_1mb = jnp.sqrt(1.0 - jnp.float32(BETA))
    sqrt_b = jnp.sqrt(jnp.float32(BETA))

    zs, prev = [], x
    for step in range(T):
        z = sqrt_1mb * prev + sqrt_b * eps[step]
        zs.append(z)
        prev = z

    mus, log_vars = [], []
    for i, step in enumerate(reversed(range(1, T))):
        h = zs[step]
        h = _leaky_relu(h @ w1[i] + b1[i])
        h = _leaky_relu(h @ w2[i] + b2[i])
        h = _leaky_relu(h @ w3[i] + b3[i])
        h = h @ w4[i] + b4[i]
        mus.append(h[:, :IN_DIM])
        log_vars.append(h[:, IN_DIM:])

    h = zs[0]
    h = _leaky_relu(h @ wf1 + bf1)
    h = _leaky_relu(h @ wf2 + bf2)
    h = _leaky_relu(h @ wf3 + bf3)
    mu_x = jnp.tanh(h @ wf4 + bf4)

    RE = jnp.sum(_normal_logprob(x, mu_x, 1.0), axis=-1)
    KL = jnp.zeros_like(RE)
    for i in range(T - 1):
        zi = zs[i]
        KL += (jnp.sum(_normal_logprob(zi, sqrt_1mb * zi, sqrt_b), axis=-1)
               - jnp.sum(_normal_logprob(zi, mus[i], jnp.exp(0.5 * log_vars[i])), axis=-1))
    zl = zs[-1]
    KL += (jnp.sum(_normal_logprob(zl, sqrt_1mb * zl, sqrt_b), axis=-1)
           - jnp.sum(_normal_logprob(zl, jnp.zeros_like(zl), 1.0), axis=-1))
    return -jnp.mean(RE - KL), -jnp.mean(RE)


# ----------------------------- param init ------------------------------------
def init_params(key):
    ks = jax.random.split(key, 16)
    s = 0.1
    f32 = jnp.float32
    params = (
        jax.random.normal(ks[0], (T - 1, IN_DIM, HID_DIM), f32) * s,      # w1
        jax.random.normal(ks[1], (T - 1, 1, HID_DIM), f32) * s,           # b1
        jax.random.normal(ks[2], (T - 1, HID_DIM, HID_DIM), f32) * s,     # w2
        jax.random.normal(ks[3], (T - 1, 1, HID_DIM), f32) * s,           # b2
        jax.random.normal(ks[4], (T - 1, HID_DIM, HID_DIM), f32) * s,     # w3
        jax.random.normal(ks[5], (T - 1, 1, HID_DIM), f32) * s,           # b3
        jax.random.normal(ks[6], (T - 1, HID_DIM, 2 * IN_DIM), f32) * s,  # w4
        jax.random.normal(ks[7], (T - 1, 1, 2 * IN_DIM), f32) * s,        # b4
        jax.random.normal(ks[8], (IN_DIM, 2 * HID_DIM), f32) * s,         # wf1
        jax.random.normal(ks[9], (1, 2 * HID_DIM), f32) * s,              # bf1
        jax.random.normal(ks[10], (2 * HID_DIM, 2 * HID_DIM), f32) * s,   # wf2
        jax.random.normal(ks[11], (1, 2 * HID_DIM), f32) * s,             # bf2
        jax.random.normal(ks[12], (2 * HID_DIM, 2 * HID_DIM), f32) * s,   # wf3
        jax.random.normal(ks[13], (1, 2 * HID_DIM), f32) * s,             # bf3
        jax.random.normal(ks[14], (2 * HID_DIM, IN_DIM), f32) * s,        # wf4
        jax.random.normal(ks[15], (1, IN_DIM), f32) * s,                  # bf4
    )
    return params


# ----------------------------- main -------------------------------------------
if __name__ == "__main__":
    key = jax.random.PRNGKey(0)
    kx, keps, kp = jax.random.split(key, 3)

    x = jax.random.normal(kx, (BATCH, IN_DIM), jnp.float32)
    eps = jax.random.normal(keps, (T, BATCH, IN_DIM), jnp.float32)
    params = init_params(kp)

    loss, neg_re = jax.jit(ddpm_forward)(x, eps, params)
    jax.block_until_ready((loss, neg_re))

    ref_loss, ref_neg_re = ddpm_reference(x, eps, params)
    np.testing.assert_allclose(np.asarray(loss), np.asarray(ref_loss),
                               rtol=5e-3, atol=1e-2)
    np.testing.assert_allclose(np.asarray(neg_re), np.asarray(ref_neg_re),
                               rtol=5e-3, atol=1e-2)

    print("KERNEL_OK")
</pallas_src>

<mosaic_0001>
module attributes {stable_mosaic.version = 11 : i64} {
  func.func @ddpm_kernel(%arg0: i32, %arg1: memref<16x256xf32, #tpu.memory_space<vmem>>, %arg2: memref<4x16x256xf32, #tpu.memory_space<vmem>>, %arg3: memref<160x64xbf16, #tpu.memory_space<vmem>>, %arg4: memref<160x160xbf16, #tpu.memory_space<vmem>>, %arg5: memref<160x160xbf16, #tpu.memory_space<vmem>>, %arg6: memref<112x160xbf16, #tpu.memory_space<vmem>>, %arg7: memref<592x1xf32, #tpu.memory_space<vmem>>, %arg8: memref<8x128xf32, #tpu.memory_space<vmem>>) attributes {dimension_semantics = [#tpu.dimension_semantics<parallel>], iteration_bounds = array<i64: 1>, scalar_prefetch = 0 : i64, scratch_operands = 0 : i64, tpu.core_type = #tpu.core_type<tc>, window_params = [{transform_indices = @transform_0, window_bounds = array<i64: 16, 256>}, {transform_indices = @transform_1, window_bounds = array<i64: 4, 16, 256>}, {pipeline_mode = #tpu.pipeline_mode<synchronous>, transform_indices = @transform_2, window_bounds = array<i64: 160, 64>}, {pipeline_mode = #tpu.pipeline_mode<synchronous>, transform_indices = @transform_3, window_bounds = array<i64: 160, 160>}, {pipeline_mode = #tpu.pipeline_mode<synchronous>, transform_indices = @transform_4, window_bounds = array<i64: 160, 160>}, {pipeline_mode = #tpu.pipeline_mode<synchronous>, transform_indices = @transform_5, window_bounds = array<i64: 112, 160>}, {pipeline_mode = #tpu.pipeline_mode<synchronous>, transform_indices = @transform_6, window_bounds = array<i64: 592, 1>}, {transform_indices = @transform_7, window_bounds = array<i64: 8, 128>}]} {
    %c0 = arith.constant 0 : index
    %c0_0 = arith.constant 0 : index
    %0 = vector.load %arg1[%c0, %c0_0] : memref<16x256xf32, #tpu.memory_space<vmem>>, vector<16x256xf32>
    %cst = arith.constant 0.994987428 : f32
    %1 = vector.broadcast %cst : f32 to vector<16x256xf32>
    %2 = arith.mulf %1, %0 : vector<16x256xf32>
    %c0_1 = arith.constant 0 : index
    %c0_2 = arith.constant 0 : index
    %c0_3 = arith.constant 0 : index
    %3 = vector.load %arg2[%c0_1, %c0_2, %c0_3] : memref<4x16x256xf32, #tpu.memory_space<vmem>>, vector<1x16x256xf32>
    %4 = vector.shape_cast %3 : vector<1x16x256xf32> to vector<16x256xf32>
    %cst_4 = arith.constant 1.000000e-01 : f32
    %5 = vector.broadcast %cst_4 : f32 to vector<16x256xf32>
    %6 = arith.mulf %5, %4 : vector<16x256xf32>
    %7 = arith.addf %2, %6 : vector<16x256xf32>
    %cst_5 = arith.constant 0.994987428 : f32
    %8 = vector.broadcast %cst_5 : f32 to vector<16x256xf32>
    %9 = arith.mulf %8, %7 : vector<16x256xf32>
    %c1 = arith.constant 1 : index
    %c0_6 = arith.constant 0 : index
    %c0_7 = arith.constant 0 : index
    %10 = vector.load %arg2[%c1, %c0_6, %c0_7] : memref<4x16x256xf32, #tpu.memory_space<vmem>>, vector<1x16x256xf32>
    %11 = vector.shape_cast %10 : vector<1x16x256xf32> to vector<16x256xf32>
    %cst_8 = arith.constant 1.000000e-01 : f32
    %12 = vector.broadcast %cst_8 : f32 to vector<16x256xf32>
    %13 = arith.mulf %12, %11 : vector<16x256xf32>
    %14 = arith.addf %9, %13 : vector<16x256xf32>
    %cst_9 = arith.constant 0.994987428 : f32
    %15 = vector.broadcast %cst_9 : f32 to vector<16x256xf32>
    %16 = arith.mulf %15, %14 : vector<16x256xf32>
    %c2 = arith.constant 2 : index
    %c0_10 = arith.constant 0 : index
    %c0_11 = arith.constant 0 : index
    %17 = vector.load %arg2[%c2, %c0_10, %c0_11] : memref<4x16x256xf32, #tpu.memory_space<vmem>>, vector<1x16x256xf32>
    %18 = vector.shape_cast %17 : vector<1x16x256xf32> to vector<16x256xf32>
    %cst_12 = arith.constant 1.000000e-01 : f32
    %19 = vector.broadcast %cst_12 : f32 to vector<16x256xf32>
    %20 = arith.mulf %19, %18 : vector<16x256xf32>
    %21 = arith.addf %16, %20 : vector<16x256xf32>
    %cst_13 = arith.constant 0.994987428 : f32
    %22 = vector.broadcast %cst_13 : f32 to vector<16x256xf32>
    %23 = arith.mulf %22, %21 : vector<16x256xf32>
    %c3 = arith.constant 3 : index
    %c0_14 = arith.constant 0 : index
    %c0_15 = arith.constant 0 : index
    %24 = vector.load %arg2[%c3, %c0_14, %c0_15] : memref<4x16x256xf32, #tpu.memory_space<vmem>>, vector<1x16x256xf32>
    %25 = vector.shape_cast %24 : vector<1x16x256xf32> to vector<16x256xf32>
    %cst_16 = arith.constant 1.000000e-01 : f32
    %26 = vector.broadcast %cst_16 : f32 to vector<16x256xf32>
    %27 = arith.mulf %26, %25 : vector<16x256xf32>
    %28 = arith.addf %23, %27 : vector<16x256xf32>
    %29 = tpu.concatenate %7, %14, %21, %28 in 0 : vector<16x256xf32>, vector<16x256xf32>, vector<16x256xf32>, vector<16x256xf32> -> vector<64x256xf32>
    %c0_17 = arith.constant 0 : index
    %c0_18 = arith.constant 0 : index
    %30 = vector.load %arg7[%c0_17, %c0_18] : memref<592x1xf32, #tpu.memory_space<vmem>>, vector<592x1xf32>
    %c0_19 = arith.constant 0 : index
    %c0_20 = arith.constant 0 : index
    %31 = vector.load %arg3[%c0_19, %c0_20] : memref<160x64xbf16, #tpu.memory_space<vmem>>, vector<160x64xbf16>
    %32 = arith.truncf %29 : vector<64x256xf32> to vector<64x256xbf16>
    %cst_21 = arith.constant dense<0.000000e+00> : vector<160x256xf32>
    %33 = tpu.matmul %31, %32, %cst_21 {dimension_numbers = #tpu.dot_dimension_numbers<[1], [0], [0], [1], [0, 0, 1, 1], [], []>} : vector<160x64xbf16>, vector<64x256xbf16>, vector<160x256xf32> -> vector<160x256xf32>
    %34 = vector.extract_strided_slice %30 {offsets = [0, 0], sizes = [160, 1], strides = [1, 1]} : vector<592x1xf32> to vector<160x1xf32>
    %35 = vector.broadcast %34 : vector<160x1xf32> to vector<160x256xf32>
    %36 = arith.addf %33, %35 : vector<160x256xf32>
    %cst_22 = arith.constant 0.000000e+00 : f32
    %37 = vector.broadcast %cst_22 : f32 to vector<160x256xf32>
    %38 = arith.cmpf oge, %36, %37 : vector<160x256xf32>
    %cst_23 = arith.constant 0.00999999977 : f32
    %39 = vector.broadcast %cst_23 : f32 to vector<160x256xf32>
    %40 = arith.mulf %39, %36 : vector<160x256xf32>
    %41 = arith.select %38, %36, %40 : vector<160x256xi1>, vector<160x256xf32>
    %c0_24 = arith.constant 0 : index
    %c0_25 = arith.constant 0 : index
    %42 = vector.load %arg4[%c0_24, %c0_25] : memref<160x160xbf16, #tpu.memory_space<vmem>>, vector<160x160xbf16>
    %43 = arith.truncf %41 : vector<160x256xf32> to vector<160x256xbf16>
    %cst_26 = arith.constant dense<0.000000e+00> : vector<160x256xf32>
    %44 = tpu.matmul %42, %43, %cst_26 {dimension_numbers = #tpu.dot_dimension_numbers<[1], [0], [0], [1], [0, 0, 1, 1], [], []>} : vector<160x160xbf16>, vector<160x256xbf16>, vector<160x256xf32> -> vector<160x256xf32>
    %45 = vector.extract_strided_slice %30 {offsets = [160, 0], sizes = [160, 1], strides = [1, 1]} : vector<592x1xf32> to vector<160x1xf32>
    %46 = vector.broadcast %45 : vector<160x1xf32> to vector<160x256xf32>
    %47 = arith.addf %44, %46 : vector<160x256xf32>
    %cst_27 = arith.constant 0.000000e+00 : f32
    %48 = vector.broadcast %cst_27 : f32 to vector<160x256xf32>
    %49 = arith.cmpf oge, %47, %48 : vector<160x256xf32>
    %cst_28 = arith.constant 0.00999999977 : f32
    %50 = vector.broadcast %cst_28 : f32 to vector<160x256xf32>
    %51 = arith.mulf %50, %47 : vector<160x256xf32>
    %52 = arith.select %49, %47, %51 : vector<160x256xi1>, vector<160x256xf32>
    %c0_29 = arith.constant 0 : index
    %c0_30 = arith.constant 0 : index
    %53 = vector.load %arg5[%c0_29, %c0_30] : memref<160x160xbf16, #tpu.memory_space<vmem>>, vector<160x160xbf16>
    %54 = arith.truncf %52 : vector<160x256xf32> to vector<160x256xbf16>
    %cst_31 = arith.constant dense<0.000000e+00> : vector<160x256xf32>
    %55 = tpu.matmul %53, %54, %cst_31 {dimension_numbers = #tpu.dot_dimension_numbers<[1], [0], [0], [1], [0, 0, 1, 1], [], []>} : vector<160x160xbf16>, vector<160x256xbf16>, vector<160x256xf32> -> vector<160x256xf32>
    %56 = vector.extract_strided_slice %30 {offsets = [320, 0], sizes = [160, 1], strides = [1, 1]} : vector<592x1xf32> to vector<160x1xf32>
    %57 = vector.broadcast %56 : vector<160x1xf32> to vector<160x256xf32>
    %58 = arith.addf %55, %57 : vector<160x256xf32>
    %cst_32 = arith.constant 0.000000e+00 : f32
    %59 = vector.broadcast %cst_32 : f32 to vector<160x256xf32>
    %60 = arith.cmpf oge, %58, %59 : vector<160x256xf32>
    %cst_33 = arith.constant 0.00999999977 : f32
    %61 = vector.broadcast %cst_33 : f32 to vector<160x256xf32>
    %62 = arith.mulf %61, %58 : vector<160x256xf32>
    %63 = arith.select %60, %58, %62 : vector<160x256xi1>, vector<160x256xf32>
    %c0_34 = arith.constant 0 : index
    %c0_35 = arith.constant 0 : index
    %64 = vector.load %arg6[%c0_34, %c0_35] : memref<112x160xbf16, #tpu.memory_space<vmem>>, vector<112x160xbf16>
    %65 = arith.truncf %63 : vector<160x256xf32> to vector<160x256xbf16>
    %cst_36 = arith.constant dense<0.000000e+00> : vector<112x256xf32>
    %66 = tpu.matmul %64, %65, %cst_36 {dimension_numbers = #tpu.dot_dimension_numbers<[1], [0], [0], [1], [0, 0, 1, 1], [], []>} : vector<112x160xbf16>, vector<160x256xbf16>, vector<112x256xf32> -> vector<112x256xf32>
    %67 = vector.extract_strided_slice %30 {offsets = [480, 0], sizes = [112, 1], strides = [1, 1]} : vector<592x1xf32> to vector<112x1xf32>
    %68 = vector.broadcast %67 : vector<112x1xf32> to vector<112x256xf32>
    %69 = arith.addf %66, %68 : vector<112x256xf32>
    %70 = vector.extract_strided_slice %69 {offsets = [0, 0], sizes = [48, 256], strides = [1, 1]} : vector<112x256xf32> to vector<48x256xf32>
    %71 = vector.extract_strided_slice %69 {offsets = [48, 0], sizes = [48, 256], strides = [1, 1]} : vector<112x256xf32> to vector<48x256xf32>
    %72 = vector.extract_strided_slice %69 {offsets = [96, 0], sizes = [16, 256], strides = [1, 1]} : vector<112x256xf32> to vector<16x256xf32>
    %73 = math.tanh %72 : vector<16x256xf32>
    %74 = arith.subf %0, %73 : vector<16x256xf32>
    %75 = arith.mulf %74, %74 : vector<16x256xf32>
    %76 = vector.shape_cast %75 : vector<16x256xf32> to vector<1x16x256xf32>
    %cst_37 = arith.constant dense<0.000000e+00> : vector<1xf32>
    %77 = vector.multi_reduction <add>, %76, %cst_37 [1, 2] : vector<1x16x256xf32> to vector<1xf32>
    %78 = vector.shape_cast %77 : vector<1xf32> to vector<1x1x1xf32>
    %79 = vector.extract %78[0, 0, 0] : f32 from vector<1x1x1xf32>
    %cst_38 = arith.constant -5.000000e-01 : f32
    %80 = arith.mulf %cst_38, %79 : f32
    %cst_39 = arith.constant 4.096000e+03 : f32
    %cst_40 = arith.constant 0.918938517 : f32
    %81 = arith.mulf %cst_39, %cst_40 : f32
    %82 = arith.subf %80, %81 : f32
    %83 = vector.extract_strided_slice %29 {offsets = [0, 0], sizes = [48, 256], strides = [1, 1]} : vector<64x256xf32> to vector<48x256xf32>
    %cst_41 = arith.constant 0.000000e+00 : f32
    %cst_42 = arith.constant 0.00125628931 : f32
    %84 = arith.subf %cst_41, %cst_42 : f32
    %85 = arith.mulf %83, %83 : vector<48x256xf32>
    %86 = vector.shape_cast %85 : vector<48x256xf32> to vector<1x48x256xf32>
    %cst_43 = arith.constant dense<0.000000e+00> : vector<1xf32>
    %87 = vector.multi_reduction <add>, %86, %cst_43 [1, 2] : vector<1x48x256xf32> to vector<1xf32>
    %88 = vector.shape_cast %87 : vector<1xf32> to vector<1x1x1xf32>
    %89 = vector.extract %88[0, 0, 0] : f32 from vector<1x1x1xf32>
    %90 = arith.mulf %84, %89 : f32
    %cst_44 = arith.constant 1.228800e+04 : f32
    %cst_45 = arith.constant -1.38364661 : f32
    %91 = arith.mulf %cst_44, %cst_45 : f32
    %92 = arith.subf %90, %91 : f32
    %93 = arith.subf %83, %70 : vector<48x256xf32>
    %94 = arith.mulf %93, %93 : vector<48x256xf32>
    %cst_46 = arith.constant -5.000000e-01 : f32
    %95 = vector.broadcast %cst_46 : f32 to vector<48x256xf32>
    %96 = arith.mulf %95, %94 : vector<48x256xf32>
    %cst_47 = arith.constant 0.000000e+00 : f32
    %97 = vector.broadcast %cst_47 : f32 to vector<48x256xf32>
    %98 = arith.subf %97, %71 : vector<48x256xf32>
    %99 = math.exp %98 : vector<48x256xf32>
    %100 = arith.mulf %96, %99 : vector<48x256xf32>
    %cst_48 = arith.constant 5.000000e-01 : f32
    %101 = vector.broadcast %cst_48 : f32 to vector<48x256xf32>
    %102 = arith.mulf %101, %71 : vector<48x256xf32>
    %103 = arith.subf %100, %102 : vector<48x256xf32>
    %104 = vector.shape_cast %103 : vector<48x256xf32> to vector<1x48x256xf32>
    %cst_49 = arith.constant dense<0.000000e+00> : vector<1xf32>
    %105 = vector.multi_reduction <add>, %104, %cst_49 [1, 2] : vector<1x48x256xf32> to vector<1xf32>
    %106 = vector.shape_cast %105 : vector<1xf32> to vector<1x1x1xf32>
    %107 = vector.extract %106[0, 0, 0] : f32 from vector<1x1x1xf32>
    %cst_50 = arith.constant 1.228800e+04 : f32
    %cst_51 = arith.constant 0.918938517 : f32
    %108 = arith.mulf %cst_50, %cst_51 : f32
    %109 = arith.subf %107, %108 : f32
    %110 = vector.extract_strided_slice %29 {offsets = [48, 0], sizes = [16, 256], strides = [1, 1]} : vector<64x256xf32> to vector<16x256xf32>
    %111 = arith.mulf %110, %110 : vector<16x256xf32>
    %112 = vector.shape_cast %111 : vector<16x256xf32> to vector<1x16x256xf32>
    %cst_52 = arith.constant dense<0.000000e+00> : vector<1xf32>
    %113 = vector.multi_reduction <add>, %112, %cst_52 [1, 2] : vector<1x16x256xf32> to vector<1xf32>
    %114 = vector.shape_cast %113 : vector<1xf32> to vector<1x1x1xf32>
    %115 = vector.extract %114[0, 0, 0] : f32 from vector<1x1x1xf32>
    %cst_53 = arith.constant 0.000000e+00 : f32
    %cst_54 = arith.constant 0.00125628931 : f32
    %116 = arith.subf %cst_53, %cst_54 : f32
    %117 = arith.mulf %116, %115 : f32
    %cst_55 = arith.constant 4.096000e+03 : f32
    %cst_56 = arith.constant -1.38364661 : f32
    %118 = arith.mulf %cst_55, %cst_56 : f32
    %119 = arith.subf %117, %118 : f32
    %cst_57 = arith.constant -5.000000e-01 : f32
    %120 = arith.mulf %cst_57, %115 : f32
    %cst_58 = arith.constant 4.096000e+03 : f32
    %cst_59 = arith.constant 0.918938517 : f32
    %121 = arith.mulf %cst_58, %cst_59 : f32
    %122 = arith.subf %120, %121 : f32
    %123 = arith.subf %92, %109 : f32
    %124 = arith.subf %119, %122 : f32
    %125 = arith.addf %123, %124 : f32
    %126 = arith.subf %82, %125 : f32
    %127 = tpu.iota {dimensions = array<i32: 0>} : vector<8x128xi32>
    %c0_i32 = arith.constant 0 : i32
    %128 = vector.broadcast %c0_i32 : i32 to vector<8x128xi32>
    %129 = arith.cmpi eq, %127, %128 : vector<8x128xi32>
    %c1_i32 = arith.constant 1 : i32
    %130 = vector.broadcast %c1_i32 : i32 to vector<8x128xi32>
    %131 = arith.cmpi eq, %127, %130 : vector<8x128xi32>
    %cst_60 = arith.constant 0.000000e+00 : f32
    %132 = vector.broadcast %82 : f32 to vector<8x128xf32>
    %133 = vector.broadcast %cst_60 : f32 to vector<8x128xf32>
    %134 = arith.select %131, %132, %133 : vector<8x128xi1>, vector<8x128xf32>
    %135 = vector.broadcast %126 : f32 to vector<8x128xf32>
    %136 = arith.select %129, %135, %134 : vector<8x128xi1>, vector<8x128xf32>
    %c0_61 = arith.constant 0 : index
    %c0_62 = arith.constant 0 : index
    %137 = vector.load %arg8[%c0_61, %c0_62] : memref<8x128xf32, #tpu.memory_space<vmem>>, vector<8x128xf32>
    tpu.vector_store %arg8[%c0_61, %c0_62], %136 {strides = array<i32>} : memref<8x128xf32, #tpu.memory_space<vmem>>, vector<8x128xf32>,
    return
  }
  func.func @transform_0(%arg0: i32) -> (i32, i32) {
    %c0_i32 = arith.constant 0 : i32
    %c0_i32_0 = arith.constant 0 : i32
    return %c0_i32, %arg0 : i32, i32
  }
  func.func @transform_1(%arg0: i32) -> (i32, i32, i32) {
    %c0_i32 = arith.constant 0 : i32
    %c0_i32_0 = arith.constant 0 : i32
    %c0_i32_1 = arith.constant 0 : i32
    return %c0_i32, %c0_i32_0, %arg0 : i32, i32, i32
  }
  func.func @transform_2(%arg0: i32) -> (i32, i32) {
    %c0_i32 = arith.constant 0 : i32
    %c0_i32_0 = arith.constant 0 : i32
    %c0_i32_1 = arith.constant 0 : i32
    return %c0_i32, %c0_i32_0 : i32, i32
  }
  func.func @transform_3(%arg0: i32) -> (i32, i32) {
    %c0_i32 = arith.constant 0 : i32
    %c0_i32_0 = arith.constant 0 : i32
    %c0_i32_1 = arith.constant 0 : i32
    return %c0_i32, %c0_i32_0 : i32, i32
  }
  func.func @transform_4(%arg0: i32) -> (i32, i32) {
    %c0_i32 = arith.constant 0 : i32
    %c0_i32_0 = arith.constant 0 : i32
    %c0_i32_1 = arith.constant 0 : i32
    return %c0_i32, %c0_i32_0 : i32, i32
  }
  func.func @transform_5(%arg0: i32) -> (i32, i32) {
    %c0_i32 = arith.constant 0 : i32
    %c0_i32_0 = arith.constant 0 : i32
    %c0_i32_1 = arith.constant 0 : i32
    return %c0_i32, %c0_i32_0 : i32, i32
  }
  func.func @transform_6(%arg0: i32) -> (i32, i32) {
    %c0_i32 = arith.constant 0 : i32
    %c0_i32_0 = arith.constant 0 : i32
    %c0_i32_1 = arith.constant 0 : i32
    return %c0_i32, %c0_i32_0 : i32, i32
  }
  func.func @transform_7(%arg0: i32) -> (i32, i32) {
    %c0_i32 = arith.constant 0 : i32
    %c0_i32_0 = arith.constant 0 : i32
    return %arg0, %c0_i32 : i32, i32
  }
}

</mosaic_0001>

<llo_original>
// kernel: ddpm_forward.1
$region0: #{ddpm_forward.1}
  #allocation0 [shape = 'u32[]', space=smem, size = 0x4, offset = 0x4, fixed_abs, tag = 'smem constant byte address 0x4 - core index']
  #allocation1 [shape = 'u32[72,128]{1,0:T(1,128)}', space=vmem, size = 0x9000, scoped, tag = 'internal scratch']
  %s0 = inlined_call_operand.vmem [shape: f32[16,256], index: 0, kind: input, shape index: {}]
  %s1 = inlined_call_operand.vmem [shape: f32[4,16,256], index: 1, kind: input, shape index: {}]
  %s2 = inlined_call_operand.vmem [shape: bf16[160,64], index: 2, kind: input, shape index: {}]
  %s3 = inlined_call_operand.vmem [shape: bf16[160,160], index: 3, kind: input, shape index: {}]
  %s4 = inlined_call_operand.vmem [shape: bf16[160,160], index: 4, kind: input, shape index: {}]
  %s5 = inlined_call_operand.vmem [shape: bf16[112,160], index: 5, kind: input, shape index: {}]
  %s6 = inlined_call_operand.vmem [shape: f32[592,1], index: 6, kind: input, shape index: {}]
  %s7 = inlined_call_operand.vmem [shape: f32[8,128], index: 7, kind: output, shape index: {}]
  %s8 = sld [smem:[#allocation0]]
  $region38: #{ddpm_forward.1} parent=0
    _
  %s10 = ssub.s32 1, %s8
  %s11 = scalar_select 0, %s10, %s8
  // Predicated region
  $region2: #{ddpm_forward.1} parent=0 // pred_check
    _
  $region3: #{ddpm_forward.1} parent=0 // pred_check_branch
    %13 = sbr.rel (0) target = $region5
  $region4: #{ddpm_forward.1} parent=0 // pred_region
    _
  $region5: #{ddpm_forward.1} parent=0 // pred_fallthru
    _
  // Predicated region
  $region6: #{ddpm_forward.1} parent=0 // pred_check
    _
  $region7: #{ddpm_forward.1} parent=0 // pred_check_branch
    %15 = sbr.rel (0) target = $region9
  $region8: #{ddpm_forward.1} parent=0 // pred_region
    _
  $region9: #{ddpm_forward.1} parent=0 // pred_fallthru
    _
  // Predicated region
  $region10: #{ddpm_forward.1} parent=0 // pred_check
    _
  $region11: #{ddpm_forward.1} parent=0 // pred_check_branch
    %17 = sbr.rel (0) target = $region13
  $region12: #{ddpm_forward.1} parent=0 // pred_region
    _
  $region13: #{ddpm_forward.1} parent=0 // pred_fallthru
    _
  // Predicated region
  $region14: #{ddpm_forward.1} parent=0 // pred_check
    _
  $region15: #{ddpm_forward.1} parent=0 // pred_check_branch
    %19 = sbr.rel (0) target = $region17
  $region16: #{ddpm_forward.1} parent=0 // pred_region
    _
  $region17: #{ddpm_forward.1} parent=0 // pred_fallthru
    _
  // Predicated region
  $region18: #{ddpm_forward.1} parent=0 // pred_check
    _
  $region19: #{ddpm_forward.1} parent=0 // pred_check_branch
    %21 = sbr.rel (0) target = $region21
  $region20: #{ddpm_forward.1} parent=0 // pred_region
    _
  $region21: #{ddpm_forward.1} parent=0 // pred_fallthru
    _
  // Predicated region
  $region22: #{ddpm_forward.1} parent=0 // pred_check
    _
  $region23: #{ddpm_forward.1} parent=0 // pred_check_branch
    %23 = sbr.rel (0) target = $region25
  $region24: #{ddpm_forward.1} parent=0 // pred_region
    _
  $region25: #{ddpm_forward.1} parent=0 // pred_fallthru
    _
  // Predicated region
  $region26: #{ddpm_forward.1} parent=0 // pred_check
    _
  $region27: #{ddpm_forward.1} parent=0 // pred_check_branch
    %25 = sbr.rel (0) target = $region29
  $region28: #{ddpm_forward.1} parent=0 // pred_region
    _
  $region29: #{ddpm_forward.1} parent=0 // pred_fallthru
    _
  %v27 = vld [vmem:[%s0] sm:$0xff]
  %v28 = vld [vmem:[%s0 + $0x8] sm:$0xff]
  %v29 = vld [vmem:[%s0 + $0x10] sm:$0xff]
  %v30 = vld [vmem:[%s0 + $0x18] sm:$0xff]
  %v31 = vmul.f32 %v27, 0.9949874
  %v32 = vmul.f32 %v28, 0.9949874
  %v33 = vmul.f32 %v29, 0.9949874
  %v34 = vmul.f32 %v30, 0.9949874
  %v35 = vld [vmem:[%s1] sm:$0xff]
  %v36 = vld [vmem:[%s1 + $0x8] sm:$0xff]
  %v37 = vld [vmem:[%s1 + $0x10] sm:$0xff]
  %v38 = vld [vmem:[%s1 + $0x18] sm:$0xff]
  %v39 = vmul.f32 %v35, 0.1
  %v40 = vmul.f32 %v36, 0.1
  %v41 = vmul.f32 %v37, 0.1
  %v42 = vmul.f32 %v38, 0.1
  %v43 = vadd.f32 %v31, %v39
  %v44 = vadd.f32 %v32, %v40
  %v45 = vadd.f32 %v33, %v41
  %v46 = vadd.f32 %v34, %v42
  %v47 = vmul.f32 %v43, 0.9949874
  %v48 = vmul.f32 %v44, 0.9949874
  %v49 = vmul.f32 %v45, 0.9949874
  %v50 = vmul.f32 %v46, 0.9949874
  %s51 = scalar_lea.vmem %s1, 32
  %v52 = vld [vmem:[%s51] sm:$0xff]
  %v53 = vld [vmem:[%s51 + $0x8] sm:$0xff]
  %v54 = vld [vmem:[%s51 + $0x10] sm:$0xff]
  %v55 = vld [vmem:[%s51 + $0x18] sm:$0xff]
  %v56 = vmul.f32 %v52, 0.1
  %v57 = vmul.f32 %v53, 0.1
  %v58 = vmul.f32 %v54, 0.1
  %v59 = vmul.f32 %v55, 0.1
  %v60 = vadd.f32 %v47, %v56
  %v61 = vadd.f32 %v48, %v57
  %v62 = vadd.f32 %v49, %v58
  %v63 = vadd.f32 %v50, %v59
  %v64 = vmul.f32 %v60, 0.9949874
  %v65 = vmul.f32 %v61, 0.9949874
  %v66 = vmul.f32 %v62, 0.9949874
  %v67 = vmul.f32 %v63, 0.9949874
  %s68 = scalar_lea.vmem %s1, 64
  %v69 = vld [vmem:[%s68] sm:$0xff]
  %v70 = vld [vmem:[%s68 + $0x8] sm:$0xff]
  %v71 = vld [vmem:[%s68 + $0x10] sm:$0xff]
  %v72 = vld [vmem:[%s68 + $0x18] sm:$0xff]
  %v73 = vmul.f32 %v69, 0.1
  %v74 = vmul.f32 %v70, 0.1
  %v75 = vmul.f32 %v71, 0.1
  %v76 = vmul.f32 %v72, 0.1
  %v77 = vadd.f32 %v64, %v73
  %v78 = vadd.f32 %v65, %v74
  %v79 = vadd.f32 %v66, %v75
  %v80 = vadd.f32 %v67, %v76
  %v81 = vmul.f32 %v77, 0.9949874
  %v82 = vmul.f32 %v78, 0.9949874
  %v83 = vmul.f32 %v79, 0.9949874
  %v84 = vmul.f32 %v80, 0.9949874
  %s85 = scalar_lea.vmem %s1, 96
  %v86 = vld [vmem:[%s85] sm:$0xff]
  %v87 = vld [vmem:[%s85 + $0x8] sm:$0xff]
  %v88 = vld [vmem:[%s85 + $0x10] sm:$0xff]
  %v89 = vld [vmem:[%s85 + $0x18] sm:$0xff]
  %v90 = vmul.f32 %v86, 0.1
  %v91 = vmul.f32 %v87, 0.1
  %v92 = vmul.f32 %v88, 0.1
  %v93 = vmul.f32 %v89, 0.1
  %v94 = vadd.f32 %v81, %v90
  %v95 = vadd.f32 %v82, %v91
  %v96 = vadd.f32 %v83, %v92
  %v97 = vadd.f32 %v84, %v93
  %v98 = vld [vmem:[%s6] sm:$0xff]
  %v99 = vld [vmem:[%s6 + $0x8] sm:$0xff]
  %v100 = vld [vmem:[%s6 + $0x10] sm:$0xff]
  %v101 = vld [vmem:[%s6 + $0x18] sm:$0xff]
  %v102 = vld [vmem:[%s6 + $0x20] sm:$0xff]
  %v103 = vld [vmem:[%s6 + $0x28] sm:$0xff]
  %v104 = vld [vmem:[%s6 + $0x30] sm:$0xff]
  %v105 = vld [vmem:[%s6 + $0x38] sm:$0xff]
  %v106 = vld [vmem:[%s6 + $0x40] sm:$0xff]
  %v107 = vld [vmem:[%s6 + $0x48] sm:$0xff]
  %v108 = vld [vmem:[%s6 + $0x50] sm:$0xff]
  %v109 = vld [vmem:[%s6 + $0x58] sm:$0xff]
  %v110 = vld [vmem:[%s6 + $0x60] sm:$0xff]
  %v111 = vld [vmem:[%s6 + $0x68] sm:$0xff]
  %v112 = vld [vmem:[%s6 + $0x70] sm:$0xff]
  %v113 = vld [vmem:[%s6 + $0x78] sm:$0xff]
  %v114 = vld [vmem:[%s6 + $0x80] sm:$0xff]
  %v115 = vld [vmem:[%s6 + $0x88] sm:$0xff]
  %v116 = vld [vmem:[%s6 + $0x90] sm:$0xff]
  %v117 = vld [vmem:[%s6 + $0x98] sm:$0xff]
  %v118 = vld [vmem:[%s6 + $0xa0] sm:$0xff]
  %v119 = vld [vmem:[%s6 + $0xa8] sm:$0xff]
  %v120 = vld [vmem:[%s6 + $0xb0] sm:$0xff]
  %v121 = vld [vmem:[%s6 + $0xb8] sm:$0xff]
  %v122 = vld [vmem:[%s6 + $0xc0] sm:$0xff]
  %v123 = vld [vmem:[%s6 + $0xc8] sm:$0xff]
  %v124 = vld [vmem:[%s6 + $0xd0] sm:$0xff]
  %v125 = vld [vmem:[%s6 + $0xd8] sm:$0xff]
  %v126 = vld [vmem:[%s6 + $0xe0] sm:$0xff]
  %v127 = vld [vmem:[%s6 + $0xe8] sm:$0xff]
  %v128 = vld [vmem:[%s6 + $0xf0] sm:$0xff]
  %v129 = vld [vmem:[%s6 + $0xf8] sm:$0xff]
  %v130 = vld [vmem:[%s6 + $0x100] sm:$0xff]
  %v131 = vld [vmem:[%s6 + $0x108] sm:$0xff]
  %v132 = vld [vmem:[%s6 + $0x110] sm:$0xff]
  %v133 = vld [vmem:[%s6 + $0x118] sm:$0xff]
  %v134 = vld [vmem:[%s6 + $0x120] sm:$0xff]
  %v135 = vld [vmem:[%s6 + $0x128] sm:$0xff]
  %v136 = vld [vmem:[%s6 + $0x130] sm:$0xff]
  %v137 = vld [vmem:[%s6 + $0x138] sm:$0xff]
  %v138 = vld [vmem:[%s6 + $0x140] sm:$0xff]
  %v139 = vld [vmem:[%s6 + $0x148] sm:$0xff]
  %v140 = vld [vmem:[%s6 + $0x150] sm:$0xff]
  %v141 = vld [vmem:[%s6 + $0x158] sm:$0xff]
  %v142 = vld [vmem:[%s6 + $0x160] sm:$0xff]
  %v143 = vld [vmem:[%s6 + $0x168] sm:$0xff]
  %v144 = vld [vmem:[%s6 + $0x170] sm:$0xff]
  %v145 = vld [vmem:[%s6 + $0x178] sm:$0xff]
  %v146 = vld [vmem:[%s6 + $0x180] sm:$0xff]
  %v147 = vld [vmem:[%s6 + $0x188] sm:$0xff]
  %v148 = vld [vmem:[%s6 + $0x190] sm:$0xff]
  %v149 = vld [vmem:[%s6 + $0x198] sm:$0xff]
  %v150 = vld [vmem:[%s6 + $0x1a0] sm:$0xff]
  %v151 = vld [vmem:[%s6 + $0x1a8] sm:$0xff]
  %v152 = vld [vmem:[%s6 + $0x1b0] sm:$0xff]
  %v153 = vld [vmem:[%s6 + $0x1b8] sm:$0xff]
  %v154 = vld [vmem:[%s6 + $0x1c0] sm:$0xff]
  %v155 = vld [vmem:[%s6 + $0x1c8] sm:$0xff]
  %v156 = vld [vmem:[%s6 + $0x1d0] sm:$0xff]
  %v157 = vld [vmem:[%s6 + $0x1d8] sm:$0xff]
  %v158 = vld [vmem:[%s6 + $0x1e0] sm:$0xff]
  %v159 = vld [vmem:[%s6 + $0x1e8] sm:$0xff]
  %v160 = vld [vmem:[%s6 + $0x1f0] sm:$0xff]
  %v161 = vld [vmem:[%s6 + $0x1f8] sm:$0xff]
  %v162 = vld [vmem:[%s6 + $0x200] sm:$0xff]
  %v163 = vld [vmem:[%s6 + $0x208] sm:$0xff]
  %v164 = vld [vmem:[%s6 + $0x210] sm:$0xff]
  %v165 = vld [vmem:[%s6 + $0x218] sm:$0xff]
  %v166 = vld [vmem:[%s6 + $0x220] sm:$0xff]
  %v167 = vld [vmem:[%s6 + $0x228] sm:$0xff]
  %v168 = vld [vmem:[%s6 + $0x230] sm:$0xff]
  %v169 = vld [vmem:[%s6 + $0x238] sm:$0xff]
  %v170 = vld [vmem:[%s6 + $0x240] sm:$0xff]
  %v171 = vld [vmem:[%s6 + $0x248] sm:$0xff]
  %v172 = vld [vmem:[%s2] sm:$0xf]
  %v173 = vld [vmem:[%s2 + $0x4] sm:$0xf]
  %v174 = vld [vmem:[%s2 + $0x8] sm:$0xf]
  %v175 = vld [vmem:[%s2 + $0xc] sm:$0xf]
  %v176 = vld [vmem:[%s2 + $0x10] sm:$0xf]
  %v177 = vld [vmem:[%s2 + $0x14] sm:$0xf]
  %v178 = vld [vmem:[%s2 + $0x18] sm:$0xf]
  %v179 = vld [vmem:[%s2 + $0x1c] sm:$0xf]
  %v180 = vld [vmem:[%s2 + $0x20] sm:$0xf]
  %v181 = vld [vmem:[%s2 + $0x24] sm:$0xf]
  %v182 = vld [vmem:[%s2 + $0x28] sm:$0xf]
  %v183 = vld [vmem:[%s2 + $0x2c] sm:$0xf]
  %v184 = vld [vmem:[%s2 + $0x30] sm:$0xf]
  %v185 = vld [vmem:[%s2 + $0x34] sm:$0xf]
  %v186 = vld [vmem:[%s2 + $0x38] sm:$0xf]
  %v187 = vld [vmem:[%s2 + $0x3c] sm:$0xf]
  %v188 = vld [vmem:[%s2 + $0x40] sm:$0xf]
  %v189 = vld [vmem:[%s2 + $0x44] sm:$0xf]
  %v190 = vld [vmem:[%s2 + $0x48] sm:$0xf]
  %v191 = vld [vmem:[%s2 + $0x4c] sm:$0xf]
  %v192 = vpack.c.bf16 %v45, %v43
  %v193 = vpack.c.bf16 %v46, %v44
  %v194 = vpack.c.bf16 %v62, %v60
  %v195 = vpack.c.bf16 %v63, %v61
  %v196 = vpack.c.bf16 %v79, %v77
  %v197 = vpack.c.bf16 %v80, %v78
  %v198 = vpack.c.bf16 %v96, %v94
  %v199 = vpack.c.bf16 %v97, %v95
  %201 = vset.pattern.permute.xlu0 0
  %202 = vperm.xlu0 %201, %v98
  %v203 = vpop.permute.xlu0 %202
  %206 = vset.pattern.permute.xlu0 0
  %207 = vperm.xlu0 %206, %v99
  %v208 = vpop.permute.xlu0 %207
  %211 = vset.pattern.permute.xlu0 0
  %212 = vperm.xlu0 %211, %v100
  %v213 = vpop.permute.xlu0 %212
  %216 = vset.pattern.permute.xlu0 0
  %217 = vperm.xlu0 %216, %v101
  %v218 = vpop.permute.xlu0 %217
  %221 = vset.pattern.permute.xlu0 0
  %222 = vperm.xlu0 %221, %v102
  %v223 = vpop.permute.xlu0 %222
  %226 = vset.pattern.permute.xlu0 0
  %227 = vperm.xlu0 %226, %v103
  %v228 = vpop.permute.xlu0 %227
  %231 = vset.pattern.permute.xlu0 0
  %232 = vperm.xlu0 %231, %v104
  %v233 = vpop.permute.xlu0 %232
  %236 = vset.pattern.permute.xlu0 0
  %237 = vperm.xlu0 %236, %v105
  %v238 = vpop.permute.xlu0 %237
  %241 = vset.pattern.permute.xlu0 0
  %242 = vperm.xlu0 %241, %v106
  %v243 = vpop.permute.xlu0 %242
  %246 = vset.pattern.permute.xlu0 0
  %247 = vperm.xlu0 %246, %v107
  %v248 = vpop.permute.xlu0 %247
  %251 = vset.pattern.permute.xlu0 0
  %252 = vperm.xlu0 %251, %v108
  %v253 = vpop.permute.xlu0 %252
  %256 = vset.pattern.permute.xlu0 0
  %257 = vperm.xlu0 %256, %v109
  %v258 = vpop.permute.xlu0 %257
  %261 = vset.pattern.permute.xlu0 0
  %262 = vperm.xlu0 %261, %v110
  %v263 = vpop.permute.xlu0 %262
  %266 = vset.pattern.permute.xlu0 0
  %267 = vperm.xlu0 %266, %v111
  %v268 = vpop.permute.xlu0 %267
  %271 = vset.pattern.permute.xlu0 0
  %272 = vperm.xlu0 %271, %v112
  %v273 = vpop.permute.xlu0 %272
  %276 = vset.pattern.permute.xlu0 0
  %277 = vperm.xlu0 %276, %v113
  %v278 = vpop.permute.xlu0 %277
  %281 = vset.pattern.permute.xlu0 0
  %282 = vperm.xlu0 %281, %v114
  %v283 = vpop.permute.xlu0 %282
  %286 = vset.pattern.permute.xlu0 0
  %287 = vperm.xlu0 %286, %v115
  %v288 = vpop.permute.xlu0 %287
  %291 = vset.pattern.permute.xlu0 0
  %292 = vperm.xlu0 %291, %v116
  %v293 = vpop.permute.xlu0 %292
  %296 = vset.pattern.permute.xlu0 0
  %297 = vperm.xlu0 %296, %v117
  %v298 = vpop.permute.xlu0 %297
  %v320 = vunpack.c.l.b16 %v172
  %v321 = vunpack.c.l.b16 %v173
  %v322 = vunpack.c.l.b16 %v174
  %v323 = vunpack.c.l.b16 %v175
  %v324 = vunpack.c.l.b16 %v176
  %v325 = vunpack.c.l.b16 %v177
  %v326 = vunpack.c.l.b16 %v178
  %v327 = vunpack.c.l.b16 %v179
  %v328 = vunpack.c.l.b16 %v180
  %v329 = vunpack.c.l.b16 %v181
  %v330 = vunpack.c.l.b16 %v182
  %v331 = vunpack.c.l.b16 %v183
  %v332 = vunpack.c.l.b16 %v184
  %v333 = vunpack.c.l.b16 %v185
  %v334 = vunpack.c.l.b16 %v186
  %v335 = vunpack.c.l.b16 %v187
  %v336 = vunpack.c.l.b16 %v188
  %v337 = vunpack.c.l.b16 %v189
  %v338 = vunpack.c.l.b16 %v190
  %v339 = vunpack.c.l.b16 %v191
  %v340 = vpack.c.b16 %v321, %v320
  %v341 = vpack.c.b16 %v323, %v322
  %v342 = vpack.c.b16 %v325, %v324
  %v343 = vpack.c.b16 %v327, %v326
  %v344 = vpack.c.b16 %v329, %v328
  %v345 = vpack.c.b16 %v331, %v330
  %v346 = vpack.c.b16 %v333, %v332
  %v347 = vpack.c.b16 %v335, %v334
  %v348 = vpack.c.b16 %v337, %v336
  %v349 = vpack.c.b16 %v339, %v338
  %vm350 = vcmask 523264
  %v352 = vsel %vm350, %v340, 0
  %v355 = vsel %vm350, %v341, 0
  %v358 = vsel %vm350, %v342, 0
  %v361 = vsel %vm350, %v343, 0
  %v364 = vsel %vm350, %v344, 0
  %v367 = vsel %vm350, %v345, 0
  %v370 = vsel %vm350, %v346, 0
  %v373 = vsel %vm350, %v347, 0
  %v376 = vsel %vm350, %v348, 0
  %v379 = vsel %vm350, %v349, 0
  %381 = vmatpush.bf16.msra.mxu0 0
  %382 = vmatpush.bf16.msra.mxu0 0
  %383 = vmatpush.bf16.msra.mxu0 0
  %384 = vmatpush.bf16.msra.mxu0 0
  %385 = vmatpush.bf16.msra.mxu0 %v198
  %386 = vmatpush.bf16.msra.mxu0 %v196
  %387 = vmatpush.bf16.msra.mxu0 %v194
  %388 = vmatpush.bf16.msra.mxu0 %v192
  %389 = vmatmul.bf16.gmra.mxu0 %v352
  %v390 = vpop.f32.mrf.mxu0
  %v391 = vadd.f32 %v203, %v390
  %v392 = vpop.f32.mrf.mxu0
  %v393 = vadd.f32 %v208, %v392
  %394 = vmatmul.bf16.gmra.mxu0 %v355
  %v395 = vpop.f32.mrf.mxu0
  %v396 = vadd.f32 %v213, %v395
  %v397 = vpop.f32.mrf.mxu0
  %v398 = vadd.f32 %v218, %v397
  %399 = vmatmul.bf16.gmra.mxu0 %v358
  %v400 = vpop.f32.mrf.mxu0
  %v401 = vadd.f32 %v223, %v400
  %v402 = vpop.f32.mrf.mxu0
  %v403 = vadd.f32 %v228, %v402
  %404 = vmatmul.bf16.gmra.mxu0 %v361
  %v405 = vpop.f32.mrf.mxu0
  %v406 = vadd.f32 %v233, %v405
  %v407 = vpop.f32.mrf.mxu0
  %v408 = vadd.f32 %v238, %v407
  %409 = vmatmul.bf16.gmra.mxu0 %v364
  %v410 = vpop.f32.mrf.mxu0
  %v411 = vadd.f32 %v243, %v410
  %v412 = vpop.f32.mrf.mxu0
  %v413 = vadd.f32 %v248, %v412
  %414 = vmatmul.bf16.gmra.mxu0 %v367
  %v415 = vpop.f32.mrf.mxu0
  %v416 = vadd.f32 %v253, %v415
  %v417 = vpop.f32.mrf.mxu0
  %v418 = vadd.f32 %v258, %v417
  %419 = vmatmul.bf16.gmra.mxu0 %v370
  %v420 = vpop.f32.mrf.mxu0
  %v421 = vadd.f32 %v263, %v420
  %v422 = vpop.f32.mrf.mxu0
  %v423 = vadd.f32 %v268, %v422
  %424 = vmatmul.bf16.gmra.mxu0 %v373
  %v425 = vpop.f32.mrf.mxu0
  %v426 = vadd.f32 %v273, %v425
  %v427 = vpop.f32.mrf.mxu0
  %v428 = vadd.f32 %v278, %v427
  %429 = vmatmul.bf16.gmra.mxu0 %v376
  %v430 = vpop.f32.mrf.mxu0
  %v431 = vadd.f32 %v283, %v430
  %v432 = vpop.f32.mrf.mxu0
  %v433 = vadd.f32 %v288, %v432
  %434 = vmatmul.bf16.gmra.mxu0 %v379
  %v435 = vpop.f32.mrf.mxu0
  %v436 = vadd.f32 %v293, %v435
  %v437 = vpop.f32.mrf.mxu0
  %v438 = vadd.f32 %v298, %v437
  %439 = vdwg.mxu0
  %440 = vmatpush.bf16.msra.mxu0 0
  %441 = vmatpush.bf16.msra.mxu0 0
  %442 = vmatpush.bf16.msra.mxu0 0
  %443 = vmatpush.bf16.msra.mxu0 0
  %444 = vmatpush.bf16.msra.mxu0 %v199
  %445 = vmatpush.bf16.msra.mxu0 %v197
  %446 = vmatpush.bf16.msra.mxu0 %v195
  %447 = vmatpush.bf16.msra.mxu0 %v193
  %448 = vmatmul.bf16.gmra.mxu0 %v352
  %v449 = vpop.f32.mrf.mxu0
  %v450 = vadd.f32 %v203, %v449
  %v451 = vpop.f32.mrf.mxu0
  %v452 = vadd.f32 %v208, %v451
  %453 = vmatmul.bf16.gmra.mxu0 %v355
  %v454 = vpop.f32.mrf.mxu0
  %v455 = vadd.f32 %v213, %v454
  %v456 = vpop.f32.mrf.mxu0
  %v457 = vadd.f32 %v218, %v456
  %458 = vmatmul.bf16.gmra.mxu0 %v358
  %v459 = vpop.f32.mrf.mxu0
  %v460 = vadd.f32 %v223, %v459
  %v461 = vpop.f32.mrf.mxu0
  %v462 = vadd.f32 %v228, %v461
  %463 = vmatmul.bf16.gmra.mxu0 %v361
  %v464 = vpop.f32.mrf.mxu0
  %v465 = vadd.f32 %v233, %v464
  %v466 = vpop.f32.mrf.mxu0
  %v467 = vadd.f32 %v238, %v466
  %468 = vmatmul.bf16.gmra.mxu0 %v364
  %v469 = vpop.f32.mrf.mxu0
  %v470 = vadd.f32 %v243, %v469
  %v471 = vpop.f32.mrf.mxu0
  %v472 = vadd.f32 %v248, %v471
  %473 = vmatmul.bf16.gmra.mxu0 %v367
  %v474 = vpop.f32.mrf.mxu0
  %v475 = vadd.f32 %v253, %v474
  %v476 = vpop.f32.mrf.mxu0
  %v477 = vadd.f32 %v258, %v476
  %478 = vmatmul.bf16.gmra.mxu0 %v370
  %v479 = vpop.f32.mrf.mxu0
  %v480 = vadd.f32 %v263, %v479
  %v481 = vpop.f32.mrf.mxu0
  %v482 = vadd.f32 %v268, %v481
  %483 = vmatmul.bf16.gmra.mxu0 %v373
  %v484 = vpop.f32.mrf.mxu0
  %v485 = vadd.f32 %v273, %v484
  %v486 = vpop.f32.mrf.mxu0
  %v487 = vadd.f32 %v278, %v486
  %488 = vmatmul.bf16.gmra.mxu0 %v376
  %v489 = vpop.f32.mrf.mxu0
  %v490 = vadd.f32 %v283, %v489
  %v491 = vpop.f32.mrf.mxu0
  %v492 = vadd.f32 %v288, %v491
  %493 = vmatmul.bf16.gmra.mxu0 %v379
  %v494 = vpop.f32.mrf.mxu0
  %v495 = vadd.f32 %v293, %v494
  %v496 = vpop.f32.mrf.mxu0
  %v497 = vadd.f32 %v298, %v496
  %498 = vdwg.mxu0
  %vm499 = vcmp.ge.f32.partialorder %v391, 0.0
  %vm500 = vcmp.ge.f32.partialorder %v450, 0.0
  %vm501 = vcmp.ge.f32.partialorder %v393, 0.0
  %vm502 = vcmp.ge.f32.partialorder %v452, 0.0
  %vm503 = vcmp.ge.f32.partialorder %v396, 0.0
  %vm504 = vcmp.ge.f32.partialorder %v455, 0.0
  %vm505 = vcmp.ge.f32.partialorder %v398, 0.0
  %vm506 = vcmp.ge.f32.partialorder %v457, 0.0
  %vm507 = vcmp.ge.f32.partialorder %v401, 0.0
  %vm508 = vcmp.ge.f32.partialorder %v460, 0.0
  %vm509 = vcmp.ge.f32.partialorder %v403, 0.0
  %vm510 = vcmp.ge.f32.partialorder %v462, 0.0
  %vm511 = vcmp.ge.f32.partialorder %v406, 0.0
  %vm512 = vcmp.ge.f32.partialorder %v465, 0.0
  %vm513 = vcmp.ge.f32.partialorder %v408, 0.0
  %vm514 = vcmp.ge.f32.partialorder %v467, 0.0
  %vm515 = vcmp.ge.f32.partialorder %v411, 0.0
  %vm516 = vcmp.ge.f32.partialorder %v470, 0.0
  %vm517 = vcmp.ge.f32.partialorder %v413, 0.0
  %vm518 = vcmp.ge.f32.partialorder %v472, 0.0
  %vm519 = vcmp.ge.f32.partialorder %v416, 0.0
  %vm520 = vcmp.ge.f32.partialorder %v475, 0.0
  %vm521 = vcmp.ge.f32.partialorder %v418, 0.0
  %vm522 = vcmp.ge.f32.partialorder %v477, 0.0
  %vm523 = vcmp.ge.f32.partialorder %v421, 0.0
  %vm524 = vcmp.ge.f32.partialorder %v480, 0.0
  %vm525 = vcmp.ge.f32.partialorder %v423, 0.0
  %vm526 = vcmp.ge.f32.partialorder %v482, 0.0
  %vm527 = vcmp.ge.f32.partialorder %v426, 0.0
  %vm528 = vcmp.ge.f32.partialorder %v485, 0.0
  %vm529 = vcmp.ge.f32.partialorder %v428, 0.0
  %vm530 = vcmp.ge.f32.partialorder %v487, 0.0
  %vm531 = vcmp.ge.f32.partialorder %v431, 0.0
  %vm532 = vcmp.ge.f32.partialorder %v490, 0.0
  %vm533 = vcmp.ge.f32.partialorder %v433, 0.0
  %vm534 = vcmp.ge.f32.partialorder %v492, 0.0
  %vm535 = vcmp.ge.f32.partialorder %v436, 0.0
  %vm536 = vcmp.ge.f32.partialorder %v495, 0.0
  %vm537 = vcmp.ge.f32.partialorder %v438, 0.0
  %vm538 = vcmp.ge.f32.partialorder %v497, 0.0
  %v539 = vmul.f32 %v391, 0.01
  %v540 = vmul.f32 %v450, 0.01
  %v541 = vmul.f32 %v393, 0.01
  %v542 = vmul.f32 %v452, 0.01
  %v543 = vmul.f32 %v396, 0.01
  %v544 = vmul.f32 %v455, 0.01
  %v545 = vmul.f32 %v398, 0.01
  %v546 = vmul.f32 %v457, 0.01
  %v547 = vmul.f32 %v401, 0.01
  %v548 = vmul.f32 %v460, 0.01
  %v549 = vmul.f32 %v403, 0.01
  %v550 = vmul.f32 %v462, 0.01
  %v551 = vmul.f32 %v406, 0.01
  %v552 = vmul.f32 %v465, 0.01
  %v553 = vmul.f32 %v408, 0.01
  %v554 = vmul.f32 %v467, 0.01
  %v555 = vmul.f32 %v411, 0.01
  %v556 = vmul.f32 %v470, 0.01
  %v557 = vmul.f32 %v413, 0.01
  %v558 = vmul.f32 %v472, 0.01
  %v559 = vmul.f32 %v416, 0.01
  %v560 = vmul.f32 %v475, 0.01
  %v561 = vmul.f32 %v418, 0.01
  %v562 = vmul.f32 %v477, 0.01
  %v563 = vmul.f32 %v421, 0.01
  %v564 = vmul.f32 %v480, 0.01
  %v565 = vmul.f32 %v423, 0.01
  %v566 = vmul.f32 %v482, 0.01
  %v567 = vmul.f32 %v426, 0.01
  %v568 = vmul.f32 %v485, 0.01
  %v569 = vmul.f32 %v428, 0.01
  %v570 = vmul.f32 %v487, 0.01
  %v571 = vmul.f32 %v431, 0.01
  %v572 = vmul.f32 %v490, 0.01
  %v573 = vmul.f32 %v433, 0.01
  %v574 = vmul.f32 %v492, 0.01
  %v575 = vmul.f32 %v436, 0.01
  %v576 = vmul.f32 %v495, 0.01
  %v577 = vmul.f32 %v438, 0.01
  %v578 = vmul.f32 %v497, 0.01
  %v579 = vsel %vm499, %v391, %v539
  %v580 = vsel %vm500, %v450, %v540
  %v581 = vsel %vm501, %v393, %v541
  %v582 = vsel %vm502, %v452, %v542
  %v583 = vsel %vm503, %v396, %v543
  %v584 = vsel %vm504, %v455, %v544
  %v585 = vsel %vm505, %v398, %v545
  %v586 = vsel %vm506, %v457, %v546
  %v587 = vsel %vm507, %v401, %v547
  %v588 = vsel %vm508, %v460, %v548
  %v589 = vsel %vm509, %v403, %v549
  %v590 = vsel %vm510, %v462, %v550
  %v591 = vsel %vm511, %v406, %v551
  %v592 = vsel %vm512, %v465, %v552
  %v593 = vsel %vm513, %v408, %v553
  %v594 = vsel %vm514, %v467, %v554
  %v595 = vsel %vm515, %v411, %v555
  %v596 = vsel %vm516, %v470, %v556
  %v597 = vsel %vm517, %v413, %v557
  %v598 = vsel %vm518, %v472, %v558
  %v599 = vsel %vm519, %v416, %v559
  %v600 = vsel %vm520, %v475, %v560
  %v601 = vsel %vm521, %v418, %v561
  %v602 = vsel %vm522, %v477, %v562
  %v603 = vsel %vm523, %v421, %v563
  %v604 = vsel %vm524, %v480, %v564
  %v605 = vsel %vm525, %v423, %v565
  %v606 = vsel %vm526, %v482, %v566
  %v607 = vsel %vm527, %v426, %v567
  %v608 = vsel %vm528, %v485, %v568
  %v609 = vsel %vm529, %v428, %v569
  %v610 = vsel %vm530, %v487, %v570
  %v611 = vsel %vm531, %v431, %v571
  %v612 = vsel %vm532, %v490, %v572
  %v613 = vsel %vm533, %v433, %v573
  %v614 = vsel %vm534, %v492, %v574
  %v615 = vsel %vm535, %v436, %v575
  %v616 = vsel %vm536, %v495, %v576
  %v617 = vsel %vm537, %v438, %v577
  %v618 = vsel %vm538, %v497, %v578
  %v619 = vld [vmem:[%s3] sm:$0xff]
  %v620 = vld [vmem:[%s3 + $0x8] sm:$0xff]
  %v621 = vld [vmem:[%s3 + $0x10] sm:$0xff]
  %v622 = vld [vmem:[%s3 + $0x18] sm:$0xff]
  %v623 = vld [vmem:[%s3 + $0x20] sm:$0xff]
  %v624 = vld [vmem:[%s3 + $0x28] sm:$0xff]
  %v625 = vld [vmem:[%s3 + $0x30] sm:$0xff]
  %v626 = vld [vmem:[%s3 + $0x38] sm:$0xff]
  %v627 = vld [vmem:[%s3 + $0x40] sm:$0xff]
  %v628 = vld [vmem:[%s3 + $0x48] sm:$0xff]
  %v629 = vld [vmem:[%s3 + $0x50] sm:$0xff]
  %v630 = vld [vmem:[%s3 + $0x58] sm:$0xff]
  %v631 = vld [vmem:[%s3 + $0x60] sm:$0xff]
  %v632 = vld [vmem:[%s3 + $0x68] sm:$0xff]
  %v633 = vld [vmem:[%s3 + $0x70] sm:$0xff]
  %v634 = vld [vmem:[%s3 + $0x78] sm:$0xff]
  %v635 = vld [vmem:[%s3 + $0x80] sm:$0xff]
  %v636 = vld [vmem:[%s3 + $0x88] sm:$0xff]
  %v637 = vld [vmem:[%s3 + $0x90] sm:$0xff]
  %v638 = vld [vmem:[%s3 + $0x98] sm:$0xff]
  %v639 = vpack.c.bf16 %v581, %v579
  %v640 = vpack.c.bf16 %v582, %v580
  %v641 = vpack.c.bf16 %v585, %v583
  %v642 = vpack.c.bf16 %v586, %v584
  %v643 = vpack.c.bf16 %v589, %v587
  %v644 = vpack.c.bf16 %v590, %v588
  %v645 = vpack.c.bf16 %v593, %v591
  %v646 = vpack.c.bf16 %v594, %v592
  %v647 = vpack.c.bf16 %v597, %v595
  %v648 = vpack.c.bf16 %v598, %v596
  %v649 = vpack.c.bf16 %v601, %v599
  %v650 = vpack.c.bf16 %v602, %v600
  %v651 = vpack.c.bf16 %v605, %v603
  %v652 = vpack.c.bf16 %v606, %v604
  %v653 = vpack.c.bf16 %v609, %v607
  %v654 = vpack.c.bf16 %v610, %v608
  %v655 = vpack.c.bf16 %v613, %v611
  %v656 = vpack.c.bf16 %v614, %v612
  %v657 = vpack.c.bf16 %v617, %v615
  %v658 = vpack.c.bf16 %v618, %v616
  %660 = vset.pattern.permute.xlu0 0
  %661 = vperm.xlu0 %660, %v118
  %v662 = vpop.permute.xlu0 %661
  %665 = vset.pattern.permute.xlu0 0
  %666 = vperm.xlu0 %665, %v119
  %v667 = vpop.permute.xlu0 %666
  %670 = vset.pattern.permute.xlu0 0
  %671 = vperm.xlu0 %670, %v120
  %v672 = vpop.permute.xlu0 %671
  %675 = vset.pattern.permute.xlu0 0
  %676 = vperm.xlu0 %675, %v121
  %v677 = vpop.permute.xlu0 %676
  %680 = vset.pattern.permute.xlu0 0
  %681 = vperm.xlu0 %680, %v122
  %v682 = vpop.permute.xlu0 %681
  %685 = vset.pattern.permute.xlu0 0
  %686 = vperm.xlu0 %685, %v123
  %v687 = vpop.permute.xlu0 %686
  %690 = vset.pattern.permute.xlu0 0
  %691 = vperm.xlu0 %690, %v124
  %v692 = vpop.permute.xlu0 %691
  %695 = vset.pattern.permute.xlu0 0
  %696 = vperm.xlu0 %695, %v125
  %v697 = vpop.permute.xlu0 %696
  %700 = vset.pattern.permute.xlu0 0
  %701 = vperm.xlu0 %700, %v126
  %v702 = vpop.permute.xlu0 %701
  %705 = vset.pattern.permute.xlu0 0
  %706 = vperm.xlu0 %705, %v127
  %v707 = vpop.permute.xlu0 %706
  %710 = vset.pattern.permute.xlu0 0
  %711 = vperm.xlu0 %710, %v128
  %v712 = vpop.permute.xlu0 %711
  %715 = vset.pattern.permute.xlu0 0
  %716 = vperm.xlu0 %715, %v129
  %v717 = vpop.permute.xlu0 %716
  %720 = vset.pattern.permute.xlu0 0
  %721 = vperm.xlu0 %720, %v130
  %v722 = vpop.permute.xlu0 %721
  %725 = vset.pattern.permute.xlu0 0
  %726 = vperm.xlu0 %725, %v131
  %v727 = vpop.permute.xlu0 %726
  %730 = vset.pattern.permute.xlu0 0
  %731 = vperm.xlu0 %730, %v132
  %v732 = vpop.permute.xlu0 %731
  %735 = vset.pattern.permute.xlu0 0
  %736 = vperm.xlu0 %735, %v133
  %v737 = vpop.permute.xlu0 %736
  %740 = vset.pattern.permute.xlu0 0
  %741 = vperm.xlu0 %740, %v134
  %v742 = vpop.permute.xlu0 %741
  %745 = vset.pattern.permute.xlu0 0
  %746 = vperm.xlu0 %745, %v135
  %v747 = vpop.permute.xlu0 %746
  %750 = vset.pattern.permute.xlu0 0
  %751 = vperm.xlu0 %750, %v136
  %v752 = vpop.permute.xlu0 %751
  %755 = vset.pattern.permute.xlu0 0
  %756 = vperm.xlu0 %755, %v137
  %v757 = vpop.permute.xlu0 %756
  %v779 = vunpack.c.l.b16 %v619
  %v780 = vunpack.c.h.b16 %v619
  %v781 = vunpack.c.l.b16 %v620
  %v782 = vunpack.c.h.b16 %v620
  %v783 = vunpack.c.l.b16 %v621
  %v784 = vunpack.c.h.b16 %v621
  %v785 = vunpack.c.l.b16 %v622
  %v786 = vunpack.c.h.b16 %v622
  %v787 = vunpack.c.l.b16 %v623
  %v788 = vunpack.c.h.b16 %v623
  %v789 = vunpack.c.l.b16 %v624
  %v790 = vunpack.c.h.b16 %v624
  %v791 = vunpack.c.l.b16 %v625
  %v792 = vunpack.c.h.b16 %v625
  %v793 = vunpack.c.l.b16 %v626
  %v794 = vunpack.c.h.b16 %v626
  %v795 = vunpack.c.l.b16 %v627
  %v796 = vunpack.c.h.b16 %v627
  %v797 = vunpack.c.l.b16 %v628
  %v798 = vunpack.c.h.b16 %v628
  %v799 = vunpack.c.l.b16 %v629
  %v800 = vunpack.c.h.b16 %v629
  %v801 = vunpack.c.l.b16 %v630
  %v802 = vunpack.c.h.b16 %v630
  %v803 = vunpack.c.l.b16 %v631
  %v804 = vunpack.c.h.b16 %v631
  %v805 = vunpack.c.l.b16 %v632
  %v806 = vunpack.c.h.b16 %v632
  %v807 = vunpack.c.l.b16 %v633
  %v808 = vunpack.c.h.b16 %v633
  %v809 = vunpack.c.l.b16 %v634
  %v810 = vunpack.c.h.b16 %v634
  %v811 = vunpack.c.l.b16 %v635
  %v812 = vunpack.c.h.b16 %v635
  %v813 = vunpack.c.l.b16 %v636
  %v814 = vunpack.c.h.b16 %v636
  %v815 = vunpack.c.l.b16 %v637
  %v816 = vunpack.c.h.b16 %v637
  %v817 = vunpack.c.l.b16 %v638
  %v818 = vunpack.c.h.b16 %v638
  %v819 = vpack.c.b16 %v781, %v779
  %v820 = vpack.c.b16 %v782, %v780
  %v821 = vpack.c.b16 %v785, %v783
  %v822 = vpack.c.b16 %v786, %v784
  %v823 = vpack.c.b16 %v789, %v787
  %v824 = vpack.c.b16 %v790, %v788
  %v825 = vpack.c.b16 %v793, %v791
  %v826 = vpack.c.b16 %v794, %v792
  %v827 = vpack.c.b16 %v797, %v795
  %v828 = vpack.c.b16 %v798, %v796
  %v829 = vpack.c.b16 %v801, %v799
  %v830 = vpack.c.b16 %v802, %v800
  %v831 = vpack.c.b16 %v805, %v803
  %v832 = vpack.c.b16 %v806, %v804
  %v833 = vpack.c.b16 %v809, %v807
  %v834 = vpack.c.b16 %v810, %v808
  %v835 = vpack.c.b16 %v813, %v811
  %v836 = vpack.c.b16 %v814, %v812
  %v837 = vpack.c.b16 %v817, %v815
  %v838 = vpack.c.b16 %v818, %v816
  %vm849 = vcmask 261120
  %v851 = vsel %vm849, %v820, 0
  %v854 = vsel %vm849, %v822, 0
  %v857 = vsel %vm849, %v824, 0
  %v860 = vsel %vm849, %v826, 0
  %v863 = vsel %vm849, %v828, 0
  %v866 = vsel %vm849, %v830, 0
  %v869 = vsel %vm849, %v832, 0
  %v872 = vsel %vm849, %v834, 0
  %v875 = vsel %vm849, %v836, 0
  %v878 = vsel %vm849, %v838, 0
  %880 = vmatpush.bf16.msra.mxu0 %v653
  %881 = vmatpush.bf16.msra.mxu0 %v651
  %882 = vmatpush.bf16.msra.mxu0 %v649
  %883 = vmatpush.bf16.msra.mxu0 %v647
  %884 = vmatpush.bf16.msra.mxu0 %v645
  %885 = vmatpush.bf16.msra.mxu0 %v643
  %886 = vmatpush.bf16.msra.mxu0 %v641
  %887 = vmatpush.bf16.msra.mxu0 %v639
  %888 = vmatmul.bf16.gmra.mxu0 %v819
  %v889 = vpop.f32.mrf.mxu0
  %v890 = vadd.f32 %v662, %v889
  %v891 = vpop.f32.mrf.mxu0
  %v892 = vadd.f32 %v667, %v891
  %893 = vmatmul.bf16.gmra.mxu0 %v821
  %v894 = vpop.f32.mrf.mxu0
  %v895 = vadd.f32 %v672, %v894
  %v896 = vpop.f32.mrf.mxu0
  %v897 = vadd.f32 %v677, %v896
  %898 = vmatmul.bf16.gmra.mxu0 %v823
  %v899 = vpop.f32.mrf.mxu0
  %v900 = vadd.f32 %v682, %v899
  %v901 = vpop.f32.mrf.mxu0
  %v902 = vadd.f32 %v687, %v901
  %903 = vmatmul.bf16.gmra.mxu0 %v825
  %v904 = vpop.f32.mrf.mxu0
  %v905 = vadd.f32 %v692, %v904
  %v906 = vpop.f32.mrf.mxu0
  %v907 = vadd.f32 %v697, %v906
  %908 = vmatmul.bf16.gmra.mxu0 %v827
  %v909 = vpop.f32.mrf.mxu0
  %v910 = vadd.f32 %v702, %v909
  %v911 = vpop.f32.mrf.mxu0
  %v912 = vadd.f32 %v707, %v911
  %913 = vmatmul.bf16.gmra.mxu0 %v829
  %v914 = vpop.f32.mrf.mxu0
  %v915 = vadd.f32 %v712, %v914
  %v916 = vpop.f32.mrf.mxu0
  %v917 = vadd.f32 %v717, %v916
  %918 = vmatmul.bf16.gmra.mxu0 %v831
  %v919 = vpop.f32.mrf.mxu0
  %v920 = vadd.f32 %v722, %v919
  %v921 = vpop.f32.mrf.mxu0
  %v922 = vadd.f32 %v727, %v921
  %923 = vmatmul.bf16.gmra.mxu0 %v833
  %v924 = vpop.f32.mrf.mxu0
  %v925 = vadd.f32 %v732, %v924
  %v926 = vpop.f32.mrf.mxu0
  %v927 = vadd.f32 %v737, %v926
  %928 = vmatmul.bf16.gmra.mxu0 %v835
  %v929 = vpop.f32.mrf.mxu0
  %v930 = vadd.f32 %v742, %v929
  %v931 = vpop.f32.mrf.mxu0
  %v932 = vadd.f32 %v747, %v931
  %933 = vmatmul.bf16.gmra.mxu0 %v837
  %v934 = vpop.f32.mrf.mxu0
  %v935 = vadd.f32 %v752, %v934
  %v936 = vpop.f32.mrf.mxu0
  %v937 = vadd.f32 %v757, %v936
  %938 = vdwg.mxu0
  %939 = vmatpush.bf16.msra.mxu0 0
  %940 = vmatpush.bf16.msra.mxu0 0
  %941 = vmatpush.bf16.msra.mxu0 0
  %942 = vmatpush.bf16.msra.mxu0 0
  %943 = vmatpush.bf16.msra.mxu0 0
  %944 = vmatpush.bf16.msra.mxu0 0
  %945 = vmatpush.bf16.msra.mxu0 %v657
  %946 = vmatpush.bf16.msra.mxu0 %v655
  %947 = vmatmul.bf16.gmra.mxu0 %v851
  %v948 = vpop.f32.mrf.mxu0
  %v949 = vadd.f32 %v890, %v948
  %v950 = vpop.f32.mrf.mxu0
  %v951 = vadd.f32 %v892, %v950
  %952 = vmatmul.bf16.gmra.mxu0 %v854
  %v953 = vpop.f32.mrf.mxu0
  %v954 = vadd.f32 %v895, %v953
  %v955 = vpop.f32.mrf.mxu0
  %v956 = vadd.f32 %v897, %v955
  %957 = vmatmul.bf16.gmra.mxu0 %v857
  %v958 = vpop.f32.mrf.mxu0
  %v959 = vadd.f32 %v900, %v958
  %v960 = vpop.f32.mrf.mxu0
  %v961 = vadd.f32 %v902, %v960
  %962 = vmatmul.bf16.gmra.mxu0 %v860
  %v963 = vpop.f32.mrf.mxu0
  %v964 = vadd.f32 %v905, %v963
  %v965 = vpop.f32.mrf.mxu0
  %v966 = vadd.f32 %v907, %v965
  %967 = vmatmul.bf16.gmra.mxu0 %v863
  %v968 = vpop.f32.mrf.mxu0
  %v969 = vadd.f32 %v910, %v968
  %v970 = vpop.f32.mrf.mxu0
  %v971 = vadd.f32 %v912, %v970
  %972 = vmatmul.bf16.gmra.mxu0 %v866
  %v973 = vpop.f32.mrf.mxu0
  %v974 = vadd.f32 %v915, %v973
  %v975 = vpop.f32.mrf.mxu0
  %v976 = vadd.f32 %v917, %v975
  %977 = vmatmul.bf16.gmra.mxu0 %v869
  %v978 = vpop.f32.mrf.mxu0
  %v979 = vadd.f32 %v920, %v978
  %v980 = vpop.f32.mrf.mxu0
  %v981 = vadd.f32 %v922, %v980
  %982 = vmatmul.bf16.gmra.mxu0 %v872
  %v983 = vpop.f32.mrf.mxu0
  %v984 = vadd.f32 %v925, %v983
  %v985 = vpop.f32.mrf.mxu0
  %v986 = vadd.f32 %v927, %v985
  %987 = vmatmul.bf16.gmra.mxu0 %v875
  %v988 = vpop.f32.mrf.mxu0
  %v989 = vadd.f32 %v930, %v988
  %v990 = vpop.f32.mrf.mxu0
  %v991 = vadd.f32 %v932, %v990
  %992 = vmatmul.bf16.gmra.mxu0 %v878
  %v993 = vpop.f32.mrf.mxu0
  %v994 = vadd.f32 %v935, %v993
  %v995 = vpop.f32.mrf.mxu0
  %v996 = vadd.f32 %v937, %v995
  %997 = vdwg.mxu0
  %998 = vmatpush.bf16.msra.mxu0 %v654
  %999 = vmatpush.bf16.msra.mxu0 %v652
  %1000 = vmatpush.bf16.msra.mxu0 %v650
  %1001 = vmatpush.bf16.msra.mxu0 %v648
  %1002 = vmatpush.bf16.msra.mxu0 %v646
  %1003 = vmatpush.bf16.msra.mxu0 %v644
  %1004 = vmatpush.bf16.msra.mxu0 %v642
  %1005 = vmatpush.bf16.msra.mxu0 %v640
  %1006 = vmatmul.bf16.gmra.mxu0 %v819
  %v1007 = vpop.f32.mrf.mxu0
  %v1008 = vadd.f32 %v662, %v1007
  %v1009 = vpop.f32.mrf.mxu0
  %v1010 = vadd.f32 %v667, %v1009
  %1011 = vmatmul.bf16.gmra.mxu0 %v821
  %v1012 = vpop.f32.mrf.mxu0
  %v1013 = vadd.f32 %v672, %v1012
  %v1014 = vpop.f32.mrf.mxu0
  %v1015 = vadd.f32 %v677, %v1014
  %1016 = vmatmul.bf16.gmra.mxu0 %v823
  %v1017 = vpop.f32.mrf.mxu0
  %v1018 = vadd.f32 %v682, %v1017
  %v1019 = vpop.f32.mrf.mxu0
  %v1020 = vadd.f32 %v687, %v1019
  %1021 = vmatmul.bf16.gmra.mxu0 %v825
  %v1022 = vpop.f32.mrf.mxu0
  %v1023 = vadd.f32 %v692, %v1022
  %v1024 = vpop.f32.mrf.mxu0
  %v1025 = vadd.f32 %v697, %v1024
  %1026 = vmatmul.bf16.gmra.mxu0 %v827
  %v1027 = vpop.f32.mrf.mxu0
  %v1028 = vadd.f32 %v702, %v1027
  %v1029 = vpop.f32.mrf.mxu0
  %v1030 = vadd.f32 %v707, %v1029
  %1031 = vmatmul.bf16.gmra.mxu0 %v829
  %v1032 = vpop.f32.mrf.mxu0
  %v1033 = vadd.f32 %v712, %v1032
  %v1034 = vpop.f32.mrf.mxu0
  %v1035 = vadd.f32 %v717, %v1034
  %1036 = vmatmul.bf16.gmra.mxu0 %v831
  %v1037 = vpop.f32.mrf.mxu0
  %v1038 = vadd.f32 %v722, %v1037
  %v1039 = vpop.f32.mrf.mxu0
  %v1040 = vadd.f32 %v727, %v1039
  %1041 = vmatmul.bf16.gmra.mxu0 %v833
  %v1042 = vpop.f32.mrf.mxu0
  %v1043 = vadd.f32 %v732, %v1042
  %v1044 = vpop.f32.mrf.mxu0
  %v1045 = vadd.f32 %v737, %v1044
  %1046 = vmatmul.bf16.gmra.mxu0 %v835
  %v1047 = vpop.f32.mrf.mxu0
  %v1048 = vadd.f32 %v742, %v1047
  %v1049 = vpop.f32.mrf.mxu0
  %v1050 = vadd.f32 %v747, %v1049
  %1051 = vmatmul.bf16.gmra.mxu0 %v837
  %v1052 = vpop.f32.mrf.mxu0
  %v1053 = vadd.f32 %v752, %v1052
  %v1054 = vpop.f32.mrf.mxu0
  %v1055 = vadd.f32 %v757, %v1054
  %1056 = vdwg.mxu0
  %1057 = vmatpush.bf16.msra.mxu0 0
  %1058 = vmatpush.bf16.msra.mxu0 0
  %1059 = vmatpush.bf16.msra.mxu0 0
  %1060 = vmatpush.bf16.msra.mxu0 0
  %1061 = vmatpush.bf16.msra.mxu0 0
  %1062 = vmatpush.bf16.msra.mxu0 0
  %1063 = vmatpush.bf16.msra.mxu0 %v658
  %1064 = vmatpush.bf16.msra.mxu0 %v656
  %1065 = vmatmul.bf16.gmra.mxu0 %v851
  %v1066 = vpop.f32.mrf.mxu0
  %v1067 = vadd.f32 %v1008, %v1066
  %v1068 = vpop.f32.mrf.mxu0
  %v1069 = vadd.f32 %v1010, %v1068
  %1070 = vmatmul.bf16.gmra.mxu0 %v854
  %v1071 = vpop.f32.mrf.mxu0
  %v1072 = vadd.f32 %v1013, %v1071
  %v1073 = vpop.f32.mrf.mxu0
  %v1074 = vadd.f32 %v1015, %v1073
  %1075 = vmatmul.bf16.gmra.mxu0 %v857
  %v1076 = vpop.f32.mrf.mxu0
  %v1077 = vadd.f32 %v1018, %v1076
  %v1078 = vpop.f32.mrf.mxu0
  %v1079 = vadd.f32 %v1020, %v1078
  %1080 = vmatmul.bf16.gmra.mxu0 %v860
  %v1081 = vpop.f32.mrf.mxu0
  %v1082 = vadd.f32 %v1023, %v1081
  %v1083 = vpop.f32.mrf.mxu0
  %v1084 = vadd.f32 %v1025, %v1083
  %1085 = vmatmul.bf16.gmra.mxu0 %v863
  %v1086 = vpop.f32.mrf.mxu0
  %v1087 = vadd.f32 %v1028, %v1086
  %v1088 = vpop.f32.mrf.mxu0
  %v1089 = vadd.f32 %v1030, %v1088
  %1090 = vmatmul.bf16.gmra.mxu0 %v866
  %v1091 = vpop.f32.mrf.mxu0
  %v1092 = vadd.f32 %v1033, %v1091
  %v1093 = vpop.f32.mrf.mxu0
  %v1094 = vadd.f32 %v1035, %v1093
  %1095 = vmatmul.bf16.gmra.mxu0 %v869
  %v1096 = vpop.f32.mrf.mxu0
  %v1097 = vadd.f32 %v1038, %v1096
  %v1098 = vpop.f32.mrf.mxu0
  %v1099 = vadd.f32 %v1040, %v1098
  %1100 = vmatmul.bf16.gmra.mxu0 %v872
  %v1101 = vpop.f32.mrf.mxu0
  %v1102 = vadd.f32 %v1043, %v1101
  %v1103 = vpop.f32.mrf.mxu0
  %v1104 = vadd.f32 %v1045, %v1103
  %1105 = vmatmul.bf16.gmra.mxu0 %v875
  %v1106 = vpop.f32.mrf.mxu0
  %v1107 = vadd.f32 %v1048, %v1106
  %v1108 = vpop.f32.mrf.mxu0
  %v1109 = vadd.f32 %v1050, %v1108
  %1110 = vmatmul.bf16.gmra.mxu0 %v878
  %v1111 = vpop.f32.mrf.mxu0
  %v1112 = vadd.f32 %v1053, %v1111
  %v1113 = vpop.f32.mrf.mxu0
  %v1114 = vadd.f32 %v1055, %v1113
  %1115 = vdwg.mxu0
  %vm1116 = vcmp.ge.f32.partialorder %v949, 0.0
  %vm1117 = vcmp.ge.f32.partialorder %v1067, 0.0
  %vm1118 = vcmp.ge.f32.partialorder %v951, 0.0
  %vm1119 = vcmp.ge.f32.partialorder %v1069, 0.0
  %vm1120 = vcmp.ge.f32.partialorder %v954, 0.0
  %vm1121 = vcmp.ge.f32.partialorder %v1072, 0.0
  %vm1122 = vcmp.ge.f32.partialorder %v956, 0.0
  %vm1123 = vcmp.ge.f32.partialorder %v1074, 0.0
  %vm1124 = vcmp.ge.f32.partialorder %v959, 0.0
  %vm1125 = vcmp.ge.f32.partialorder %v1077, 0.0
  %vm1126 = vcmp.ge.f32.partialorder %v961, 0.0
  %vm1127 = vcmp.ge.f32.partialorder %v1079, 0.0
  %vm1128 = vcmp.ge.f32.partialorder %v964, 0.0
  %vm1129 = vcmp.ge.f32.partialorder %v1082, 0.0
  %vm1130 = vcmp.ge.f32.partialorder %v966, 0.0
  %vm1131 = vcmp.ge.f32.partialorder %v1084, 0.0
  %vm1132 = vcmp.ge.f32.partialorder %v969, 0.0
  %vm1133 = vcmp.ge.f32.partialorder %v1087, 0.0
  %vm1134 = vcmp.ge.f32.partialorder %v971, 0.0
  %vm1135 = vcmp.ge.f32.partialorder %v1089, 0.0
  %vm1136 = vcmp.ge.f32.partialorder %v974, 0.0
  %vm1137 = vcmp.ge.f32.partialorder %v1092, 0.0
  %vm1138 = vcmp.ge.f32.partialorder %v976, 0.0
  %vm1139 = vcmp.ge.f32.partialorder %v1094, 0.0
  %vm1140 = vcmp.ge.f32.partialorder %v979, 0.0
  %vm1141 = vcmp.ge.f32.partialorder %v1097, 0.0
  %vm1142 = vcmp.ge.f32.partialorder %v981, 0.0
  %vm1143 = vcmp.ge.f32.partialorder %v1099, 0.0
  %vm1144 = vcmp.ge.f32.partialorder %v984, 0.0
  %vm1145 = vcmp.ge.f32.partialorder %v1102, 0.0
  %vm1146 = vcmp.ge.f32.partialorder %v986, 0.0
  %vm1147 = vcmp.ge.f32.partialorder %v1104, 0.0
  %vm1148 = vcmp.ge.f32.partialorder %v989, 0.0
  %vm1149 = vcmp.ge.f32.partialorder %v1107, 0.0
  %vm1150 = vcmp.ge.f32.partialorder %v991, 0.0
  %vm1151 = vcmp.ge.f32.partialorder %v1109, 0.0
  %vm1152 = vcmp.ge.f32.partialorder %v994, 0.0
  %vm1153 = vcmp.ge.f32.partialorder %v1112, 0.0
  %vm1154 = vcmp.ge.f32.partialorder %v996, 0.0
  %vm1155 = vcmp.ge.f32.partialorder %v1114, 0.0
  %v1156 = vmul.f32 %v949, 0.01
  %v1157 = vmul.f32 %v1067, 0.01
  %v1158 = vmul.f32 %v951, 0.01
  %v1159 = vmul.f32 %v1069, 0.01
  %v1160 = vmul.f32 %v954, 0.01
  %v1161 = vmul.f32 %v1072, 0.01
  %v1162 = vmul.f32 %v956, 0.01
  %v1163 = vmul.f32 %v1074, 0.01
  %v1164 = vmul.f32 %v959, 0.01
  %v1165 = vmul.f32 %v1077, 0.01
  %v1166 = vmul.f32 %v961, 0.01
  %v1167 = vmul.f32 %v1079, 0.01
  %v1168 = vmul.f32 %v964, 0.01
  %v1169 = vmul.f32 %v1082, 0.01
  %v1170 = vmul.f32 %v966, 0.01
  %v1171 = vmul.f32 %v1084, 0.01
  %v1172 = vmul.f32 %v969, 0.01
  %v1173 = vmul.f32 %v1087, 0.01
  %v1174 = vmul.f32 %v971, 0.01
  %v1175 = vmul.f32 %v1089, 0.01
  %v1176 = vmul.f32 %v974, 0.01
  %v1177 = vmul.f32 %v1092, 0.01
  %v1178 = vmul.f32 %v976, 0.01
  %v1179 = vmul.f32 %v1094, 0.01
  %v1180 = vmul.f32 %v979, 0.01
  %v1181 = vmul.f32 %v1097, 0.01
  %v1182 = vmul.f32 %v981, 0.01
  %v1183 = vmul.f32 %v1099, 0.01
  %v1184 = vmul.f32 %v984, 0.01
  %v1185 = vmul.f32 %v1102, 0.01
  %v1186 = vmul.f32 %v986, 0.01
  %v1187 = vmul.f32 %v1104, 0.01
  %v1188 = vmul.f32 %v989, 0.01
  %v1189 = vmul.f32 %v1107, 0.01
  %v1190 = vmul.f32 %v991, 0.01
  %v1191 = vmul.f32 %v1109, 0.01
  %v1192 = vmul.f32 %v994, 0.01
  %v1193 = vmul.f32 %v1112, 0.01
  %v1194 = vmul.f32 %v996, 0.01
  %v1195 = vmul.f32 %v1114, 0.01
  %v1196 = vsel %vm1116, %v949, %v1156
  %v1197 = vsel %vm1117, %v1067, %v1157
  %v1198 = vsel %vm1118, %v951, %v1158
  %v1199 = vsel %vm1119, %v1069, %v1159
  %v1200 = vsel %vm1120, %v954, %v1160
  %v1201 = vsel %vm1121, %v1072, %v1161
  %v1202 = vsel %vm1122, %v956, %v1162
  %v1203 = vsel %vm1123, %v1074, %v1163
  %v1204 = vsel %vm1124, %v959, %v1164
  %v1205 = vsel %vm1125, %v1077, %v1165
  %v1206 = vsel %vm1126, %v961, %v1166
  %v1207 = vsel %vm1127, %v1079, %v1167
  %v1208 = vsel %vm1128, %v964, %v1168
  %v1209 = vsel %vm1129, %v1082, %v1169
  %v1210 = vsel %vm1130, %v966, %v1170
  %v1211 = vsel %vm1131, %v1084, %v1171
  %v1212 = vsel %vm1132, %v969, %v1172
  %v1213 = vsel %vm1133, %v1087, %v1173
  %v1214 = vsel %vm1134, %v971, %v1174
  %v1215 = vsel %vm1135, %v1089, %v1175
  %v1216 = vsel %vm1136, %v974, %v1176
  %v1217 = vsel %vm1137, %v1092, %v1177
  %v1218 = vsel %vm1138, %v976, %v1178
  %v1219 = vsel %vm1139, %v1094, %v1179
  %v1220 = vsel %vm1140, %v979, %v1180
  %v1221 = vsel %vm1141, %v1097, %v1181
  %v1222 = vsel %vm1142, %v981, %v1182
  %v1223 = vsel %vm1143, %v1099, %v1183
  %v1224 = vsel %vm1144, %v984, %v1184
  %v1225 = vsel %vm1145, %v1102, %v1185
  %v1226 = vsel %vm1146, %v986, %v1186
  %v1227 = vsel %vm1147, %v1104, %v1187
  %v1228 = vsel %vm1148, %v989, %v1188
  %v1229 = vsel %vm1149, %v1107, %v1189
  %v1230 = vsel %vm1150, %v991, %v1190
  %v1231 = vsel %vm1151, %v1109, %v1191
  %v1232 = vsel %vm1152, %v994, %v1192
  %v1233 = vsel %vm1153, %v1112, %v1193
  %v1234 = vsel %vm1154, %v996, %v1194
  %v1235 = vsel %vm1155, %v1114, %v1195
  %v1236 = vld [vmem:[%s4] sm:$0xff]
  %v1237 = vld [vmem:[%s4 + $0x8] sm:$0xff]
  %v1238 = vld [vmem:[%s4 + $0x10] sm:$0xff]
  %v1239 = vld [vmem:[%s4 + $0x18] sm:$0xff]
  %v1240 = vld [vmem:[%s4 + $0x20] sm:$0xff]
  %v1241 = vld [vmem:[%s4 + $0x28] sm:$0xff]
  %v1242 = vld [vmem:[%s4 + $0x30] sm:$0xff]
  %v1243 = vld [vmem:[%s4 + $0x38] sm:$0xff]
  %v1244 = vld [vmem:[%s4 + $0x40] sm:$0xff]
  %v1245 = vld [vmem:[%s4 + $0x48] sm:$0xff]
  %v1246 = vld [vmem:[%s4 + $0x50] sm:$0xff]
  %v1247 = vld [vmem:[%s4 + $0x58] sm:$0xff]
  %v1248 = vld [vmem:[%s4 + $0x60] sm:$0xff]
  %v1249 = vld [vmem:[%s4 + $0x68] sm:$0xff]
  %v1250 = vld [vmem:[%s4 + $0x70] sm:$0xff]
  %v1251 = vld [vmem:[%s4 + $0x78] sm:$0xff]
  %v1252 = vld [vmem:[%s4 + $0x80] sm:$0xff]
  %v1253 = vld [vmem:[%s4 + $0x88] sm:$0xff]
  %v1254 = vld [vmem:[%s4 + $0x90] sm:$0xff]
  %v1255 = vld [vmem:[%s4 + $0x98] sm:$0xff]
  %v1256 = vpack.c.bf16 %v1198, %v1196
  %v1257 = vpack.c.bf16 %v1199, %v1197
  %v1258 = vpack.c.bf16 %v1202, %v1200
  %v1259 = vpack.c.bf16 %v1203, %v1201
  %v1260 = vpack.c.bf16 %v1206, %v1204
  %v1261 = vpack.c.bf16 %v1207, %v1205
  %v1262 = vpack.c.bf16 %v1210, %v1208
  %v1263 = vpack.c.bf16 %v1211, %v1209
  %v1264 = vpack.c.bf16 %v1214, %v1212
  %v1265 = vpack.c.bf16 %v1215, %v1213
  %v1266 = vpack.c.bf16 %v1218, %v1216
  %v1267 = vpack.c.bf16 %v1219, %v1217
  %v1268 = vpack.c.bf16 %v1222, %v1220
  %v1269 = vpack.c.bf16 %v1223, %v1221
  %v1270 = vpack.c.bf16 %v1226, %v1224
  %v1271 = vpack.c.bf16 %v1227, %v1225
  %v1272 = vpack.c.bf16 %v1230, %v1228
  %v1273 = vpack.c.bf16 %v1231, %v1229
  %v1274 = vpack.c.bf16 %v1234, %v1232
  %v1275 = vpack.c.bf16 %v1235, %v1233
  %1277 = vset.pattern.permute.xlu0 0
  %1278 = vperm.xlu0 %1277, %v138
  %v1279 = vpop.permute.xlu0 %1278
  %1282 = vset.pattern.permute.xlu0 0
  %1283 = vperm.xlu0 %1282, %v139
  %v1284 = vpop.permute.xlu0 %1283
  %1287 = vset.pattern.permute.xlu0 0
  %1288 = vperm.xlu0 %1287, %v140
  %v1289 = vpop.permute.xlu0 %1288
  %1292 = vset.pattern.permute.xlu0 0
  %1293 = vperm.xlu0 %1292, %v141
  %v1294 = vpop.permute.xlu0 %1293
  %1297 = vset.pattern.permute.xlu0 0
  %1298 = vperm.xlu0 %1297, %v142
  %v1299 = vpop.permute.xlu0 %1298
  %1302 = vset.pattern.permute.xlu0 0
  %1303 = vperm.xlu0 %1302, %v143
  %v1304 = vpop.permute.xlu0 %1303
  %1307 = vset.pattern.permute.xlu0 0
  %1308 = vperm.xlu0 %1307, %v144
  %v1309 = vpop.permute.xlu0 %1308
  %1312 = vset.pattern.permute.xlu0 0
  %1313 = vperm.xlu0 %1312, %v145
  %v1314 = vpop.permute.xlu0 %1313
  %1317 = vset.pattern.permute.xlu0 0
  %1318 = vperm.xlu0 %1317, %v146
  %v1319 = vpop.permute.xlu0 %1318
  %1322 = vset.pattern.permute.xlu0 0
  %1323 = vperm.xlu0 %1322, %v147
  %v1324 = vpop.permute.xlu0 %1323
  %1327 = vset.pattern.permute.xlu0 0
  %1328 = vperm.xlu0 %1327, %v148
  %v1329 = vpop.permute.xlu0 %1328
  %1332 = vset.pattern.permute.xlu0 0
  %1333 = vperm.xlu0 %1332, %v149
  %v1334 = vpop.permute.xlu0 %1333
  %1337 = vset.pattern.permute.xlu0 0
  %1338 = vperm.xlu0 %1337, %v150
  %v1339 = vpop.permute.xlu0 %1338
  %1342 = vset.pattern.permute.xlu0 0
  %1343 = vperm.xlu0 %1342, %v151
  %v1344 = vpop.permute.xlu0 %1343
  %1347 = vset.pattern.permute.xlu0 0
  %1348 = vperm.xlu0 %1347, %v152
  %v1349 = vpop.permute.xlu0 %1348
  %1352 = vset.pattern.permute.xlu0 0
  %1353 = vperm.xlu0 %1352, %v153
  %v1354 = vpop.permute.xlu0 %1353
  %1357 = vset.pattern.permute.xlu0 0
  %1358 = vperm.xlu0 %1357, %v154
  %v1359 = vpop.permute.xlu0 %1358
  %1362 = vset.pattern.permute.xlu0 0
  %1363 = vperm.xlu0 %1362, %v155
  %v1364 = vpop.permute.xlu0 %1363
  %1367 = vset.pattern.permute.xlu0 0
  %1368 = vperm.xlu0 %1367, %v156
  %v1369 = vpop.permute.xlu0 %1368
  %1372 = vset.pattern.permute.xlu0 0
  %1373 = vperm.xlu0 %1372, %v157
  %v1374 = vpop.permute.xlu0 %1373
  %v1396 = vunpack.c.l.b16 %v1236
  %v1397 = vunpack.c.h.b16 %v1236
  %v1398 = vunpack.c.l.b16 %v1237
  %v1399 = vunpack.c.h.b16 %v1237
  %v1400 = vunpack.c.l.b16 %v1238
  %v1401 = vunpack.c.h.b16 %v1238
  %v1402 = vunpack.c.l.b16 %v1239
  %v1403 = vunpack.c.h.b16 %v1239
  %v1404 = vunpack.c.l.b16 %v1240
  %v1405 = vunpack.c.h.b16 %v1240
  %v1406 = vunpack.c.l.b16 %v1241
  %v1407 = vunpack.c.h.b16 %v1241
  %v1408 = vunpack.c.l.b16 %v1242
  %v1409 = vunpack.c.h.b16 %v1242
  %v1410 = vunpack.c.l.b16 %v1243
  %v1411 = vunpack.c.h.b16 %v1243
  %v1412 = vunpack.c.l.b16 %v1244
  %v1413 = vunpack.c.h.b16 %v1244
  %v1414 = vunpack.c.l.b16 %v1245
  %v1415 = vunpack.c.h.b16 %v1245
  %v1416 = vunpack.c.l.b16 %v1246
  %v1417 = vunpack.c.h.b16 %v1246
  %v1418 = vunpack.c.l.b16 %v1247
  %v1419 = vunpack.c.h.b16 %v1247
  %v1420 = vunpack.c.l.b16 %v1248
  %v1421 = vunpack.c.h.b16 %v1248
  %v1422 = vunpack.c.l.b16 %v1249
  %v1423 = vunpack.c.h.b16 %v1249
  %v1424 = vunpack.c.l.b16 %v1250
  %v1425 = vunpack.c.h.b16 %v1250
  %v1426 = vunpack.c.l.b16 %v1251
  %v1427 = vunpack.c.h.b16 %v1251
  %v1428 = vunpack.c.l.b16 %v1252
  %v1429 = vunpack.c.h.b16 %v1252
  %v1430 = vunpack.c.l.b16 %v1253
  %v1431 = vunpack.c.h.b16 %v1253
  %v1432 = vunpack.c.l.b16 %v1254
  %v1433 = vunpack.c.h.b16 %v1254
  %v1434 = vunpack.c.l.b16 %v1255
  %v1435 = vunpack.c.h.b16 %v1255
  %v1436 = vpack.c.b16 %v1398, %v1396
  %v1437 = vpack.c.b16 %v1399, %v1397
  %v1438 = vpack.c.b16 %v1402, %v1400
  %v1439 = vpack.c.b16 %v1403, %v1401
  %v1440 = vpack.c.b16 %v1406, %v1404
  %v1441 = vpack.c.b16 %v1407, %v1405
  %v1442 = vpack.c.b16 %v1410, %v1408
  %v1443 = vpack.c.b16 %v1411, %v1409
  %v1444 = vpack.c.b16 %v1414, %v1412
  %v1445 = vpack.c.b16 %v1415, %v1413
  %v1446 = vpack.c.b16 %v1418, %v1416
  %v1447 = vpack.c.b16 %v1419, %v1417
  %v1448 = vpack.c.b16 %v1422, %v1420
  %v1449 = vpack.c.b16 %v1423, %v1421
  %v1450 = vpack.c.b16 %v1426, %v1424
  %v1451 = vpack.c.b16 %v1427, %v1425
  %v1452 = vpack.c.b16 %v1430, %v1428
  %v1453 = vpack.c.b16 %v1431, %v1429
  %v1454 = vpack.c.b16 %v1434, %v1432
  %v1455 = vpack.c.b16 %v1435, %v1433
  %v1467 = vsel %vm849, %v1437, 0
  %v1470 = vsel %vm849, %v1439, 0
  %v1473 = vsel %vm849, %v1441, 0
  %v1476 = vsel %vm849, %v1443, 0
  %v1479 = vsel %vm849, %v1445, 0
  %v1482 = vsel %vm849, %v1447, 0
  %v1485 = vsel %vm849, %v1449, 0
  %v1488 = vsel %vm849, %v1451, 0
  %v1491 = vsel %vm849, %v1453, 0
  %v1494 = vsel %vm849, %v1455, 0
  %1496 = vmatpush.bf16.msra.mxu0 %v1270
  %1497 = vmatpush.bf16.msra.mxu0 %v1268
  %1498 = vmatpush.bf16.msra.mxu0 %v1266
  %1499 = vmatpush.bf16.msra.mxu0 %v1264
  %1500 = vmatpush.bf16.msra.mxu0 %v1262
  %1501 = vmatpush.bf16.msra.mxu0 %v1260
  %1502 = vmatpush.bf16.msra.mxu0 %v1258
  %1503 = vmatpush.bf16.msra.mxu0 %v1256
  %1504 = vmatmul.bf16.gmra.mxu0 %v1436
  %v1505 = vpop.f32.mrf.mxu0
  %v1506 = vadd.f32 %v1279, %v1505
  %v1507 = vpop.f32.mrf.mxu0
  %v1508 = vadd.f32 %v1284, %v1507
  %1509 = vmatmul.bf16.gmra.mxu0 %v1438
  %v1510 = vpop.f32.mrf.mxu0
  %v1511 = vadd.f32 %v1289, %v1510
  %v1512 = vpop.f32.mrf.mxu0
  %v1513 = vadd.f32 %v1294, %v1512
  %1514 = vmatmul.bf16.gmra.mxu0 %v1440
  %v1515 = vpop.f32.mrf.mxu0
  %v1516 = vadd.f32 %v1299, %v1515
  %v1517 = vpop.f32.mrf.mxu0
  %v1518 = vadd.f32 %v1304, %v1517
  %1519 = vmatmul.bf16.gmra.mxu0 %v1442
  %v1520 = vpop.f32.mrf.mxu0
  %v1521 = vadd.f32 %v1309, %v1520
  %v1522 = vpop.f32.mrf.mxu0
  %v1523 = vadd.f32 %v1314, %v1522
  %1524 = vmatmul.bf16.gmra.mxu0 %v1444
  %v1525 = vpop.f32.mrf.mxu0
  %v1526 = vadd.f32 %v1319, %v1525
  %v1527 = vpop.f32.mrf.mxu0
  %v1528 = vadd.f32 %v1324, %v1527
  %1529 = vmatmul.bf16.gmra.mxu0 %v1446
  %v1530 = vpop.f32.mrf.mxu0
  %v1531 = vadd.f32 %v1329, %v1530
  %v1532 = vpop.f32.mrf.mxu0
  %v1533 = vadd.f32 %v1334, %v1532
  %1534 = vmatmul.bf16.gmra.mxu0 %v1448
  %v1535 = vpop.f32.mrf.mxu0
  %v1536 = vadd.f32 %v1339, %v1535
  %v1537 = vpop.f32.mrf.mxu0
  %v1538 = vadd.f32 %v1344, %v1537
  %1539 = vmatmul.bf16.gmra.mxu0 %v1450
  %v1540 = vpop.f32.mrf.mxu0
  %v1541 = vadd.f32 %v1349, %v1540
  %v1542 = vpop.f32.mrf.mxu0
  %v1543 = vadd.f32 %v1354, %v1542
  %1544 = vmatmul.bf16.gmra.mxu0 %v1452
  %v1545 = vpop.f32.mrf.mxu0
  %v1546 = vadd.f32 %v1359, %v1545
  %v1547 = vpop.f32.mrf.mxu0
  %v1548 = vadd.f32 %v1364, %v1547
  %1549 = vmatmul.bf16.gmra.mxu0 %v1454
  %v1550 = vpop.f32.mrf.mxu0
  %v1551 = vadd.f32 %v1369, %v1550
  %v1552 = vpop.f32.mrf.mxu0
  %v1553 = vadd.f32 %v1374, %v1552
  %1554 = vdwg.mxu0
  %1555 = vmatpush.bf16.msra.mxu0 0
  %1556 = vmatpush.bf16.msra.mxu0 0
  %1557 = vmatpush.bf16.msra.mxu0 0
  %1558 = vmatpush.bf16.msra.mxu0 0
  %1559 = vmatpush.bf16.msra.mxu0 0
  %1560 = vmatpush.bf16.msra.mxu0 0
  %1561 = vmatpush.bf16.msra.mxu0 %v1274
  %1562 = vmatpush.bf16.msra.mxu0 %v1272
  %1563 = vmatmul.bf16.gmra.mxu0 %v1467
  %v1564 = vpop.f32.mrf.mxu0
  %v1565 = vadd.f32 %v1506, %v1564
  %v1566 = vpop.f32.mrf.mxu0
  %v1567 = vadd.f32 %v1508, %v1566
  %1568 = vmatmul.bf16.gmra.mxu0 %v1470
  %v1569 = vpop.f32.mrf.mxu0
  %v1570 = vadd.f32 %v1511, %v1569
  %v1571 = vpop.f32.mrf.mxu0
  %v1572 = vadd.f32 %v1513, %v1571
  %1573 = vmatmul.bf16.gmra.mxu0 %v1473
  %v1574 = vpop.f32.mrf.mxu0
  %v1575 = vadd.f32 %v1516, %v1574
  %v1576 = vpop.f32.mrf.mxu0
  %v1577 = vadd.f32 %v1518, %v1576
  %1578 = vmatmul.bf16.gmra.mxu0 %v1476
  %v1579 = vpop.f32.mrf.mxu0
  %v1580 = vadd.f32 %v1521, %v1579
  %v1581 = vpop.f32.mrf.mxu0
  %v1582 = vadd.f32 %v1523, %v1581
  %1583 = vmatmul.bf16.gmra.mxu0 %v1479
  %v1584 = vpop.f32.mrf.mxu0
  %v1585 = vadd.f32 %v1526, %v1584
  %v1586 = vpop.f32.mrf.mxu0
  %v1587 = vadd.f32 %v1528, %v1586
  %1588 = vmatmul.bf16.gmra.mxu0 %v1482
  %v1589 = vpop.f32.mrf.mxu0
  %v1590 = vadd.f32 %v1531, %v1589
  %v1591 = vpop.f32.mrf.mxu0
  %v1592 = vadd.f32 %v1533, %v1591
  %1593 = vmatmul.bf16.gmra.mxu0 %v1485
  %v1594 = vpop.f32.mrf.mxu0
  %v1595 = vadd.f32 %v1536, %v1594
  %v1596 = vpop.f32.mrf.mxu0
  %v1597 = vadd.f32 %v1538, %v1596
  %1598 = vmatmul.bf16.gmra.mxu0 %v1488
  %v1599 = vpop.f32.mrf.mxu0
  %v1600 = vadd.f32 %v1541, %v1599
  %v1601 = vpop.f32.mrf.mxu0
  %v1602 = vadd.f32 %v1543, %v1601
  %1603 = vmatmul.bf16.gmra.mxu0 %v1491
  %v1604 = vpop.f32.mrf.mxu0
  %v1605 = vadd.f32 %v1546, %v1604
  %v1606 = vpop.f32.mrf.mxu0
  %v1607 = vadd.f32 %v1548, %v1606
  %1608 = vmatmul.bf16.gmra.mxu0 %v1494
  %v1609 = vpop.f32.mrf.mxu0
  %v1610 = vadd.f32 %v1551, %v1609
  %v1611 = vpop.f32.mrf.mxu0
  %v1612 = vadd.f32 %v1553, %v1611
  %1613 = vdwg.mxu0
  %1614 = vmatpush.bf16.msra.mxu0 %v1271
  %1615 = vmatpush.bf16.msra.mxu0 %v1269
  %1616 = vmatpush.bf16.msra.mxu0 %v1267
  %1617 = vmatpush.bf16.msra.mxu0 %v1265
  %1618 = vmatpush.bf16.msra.mxu0 %v1263
  %1619 = vmatpush.bf16.msra.mxu0 %v1261
  %1620 = vmatpush.bf16.msra.mxu0 %v1259
  %1621 = vmatpush.bf16.msra.mxu0 %v1257
  %1622 = vmatmul.bf16.gmra.mxu0 %v1436
  %v1623 = vpop.f32.mrf.mxu0
  %v1624 = vadd.f32 %v1279, %v1623
  %v1625 = vpop.f32.mrf.mxu0
  %v1626 = vadd.f32 %v1284, %v1625
  %1627 = vmatmul.bf16.gmra.mxu0 %v1438
  %v1628 = vpop.f32.mrf.mxu0
  %v1629 = vadd.f32 %v1289, %v1628
  %v1630 = vpop.f32.mrf.mxu0
  %v1631 = vadd.f32 %v1294, %v1630
  %1632 = vmatmul.bf16.gmra.mxu0 %v1440
  %v1633 = vpop.f32.mrf.mxu0
  %v1634 = vadd.f32 %v1299, %v1633
  %v1635 = vpop.f32.mrf.mxu0
  %v1636 = vadd.f32 %v1304, %v1635
  %1637 = vmatmul.bf16.gmra.mxu0 %v1442
  %v1638 = vpop.f32.mrf.mxu0
  %v1639 = vadd.f32 %v1309, %v1638
  %v1640 = vpop.f32.mrf.mxu0
  %v1641 = vadd.f32 %v1314, %v1640
  %1642 = vmatmul.bf16.gmra.mxu0 %v1444
  %v1643 = vpop.f32.mrf.mxu0
  %v1644 = vadd.f32 %v1319, %v1643
  %v1645 = vpop.f32.mrf.mxu0
  %v1646 = vadd.f32 %v1324, %v1645
  %1647 = vmatmul.bf16.gmra.mxu0 %v1446
  %v1648 = vpop.f32.mrf.mxu0
  %v1649 = vadd.f32 %v1329, %v1648
  %v1650 = vpop.f32.mrf.mxu0
  %v1651 = vadd.f32 %v1334, %v1650
  %1652 = vmatmul.bf16.gmra.mxu0 %v1448
  %v1653 = vpop.f32.mrf.mxu0
  %v1654 = vadd.f32 %v1339, %v1653
  %v1655 = vpop.f32.mrf.mxu0
  %v1656 = vadd.f32 %v1344, %v1655
  %1657 = vmatmul.bf16.gmra.mxu0 %v1450
  %v1658 = vpop.f32.mrf.mxu0
  %v1659 = vadd.f32 %v1349, %v1658
  %v1660 = vpop.f32.mrf.mxu0
  %v1661 = vadd.f32 %v1354, %v1660
  %1662 = vmatmul.bf16.gmra.mxu0 %v1452
  %v1663 = vpop.f32.mrf.mxu0
  %v1664 = vadd.f32 %v1359, %v1663
  %v1665 = vpop.f32.mrf.mxu0
  %v1666 = vadd.f32 %v1364, %v1665
  %1667 = vmatmul.bf16.gmra.mxu0 %v1454
  %v1668 = vpop.f32.mrf.mxu0
  %v1669 = vadd.f32 %v1369, %v1668
  %v1670 = vpop.f32.mrf.mxu0
  %v1671 = vadd.f32 %v1374, %v1670
  %1672 = vdwg.mxu0
  %1673 = vmatpush.bf16.msra.mxu0 0
  %1674 = vmatpush.bf16.msra.mxu0 0
  %1675 = vmatpush.bf16.msra.mxu0 0
  %1676 = vmatpush.bf16.msra.mxu0 0
  %1677 = vmatpush.bf16.msra.mxu0 0
  %1678 = vmatpush.bf16.msra.mxu0 0
  %1679 = vmatpush.bf16.msra.mxu0 %v1275
  %1680 = vmatpush.bf16.msra.mxu0 %v1273
  %1681 = vmatmul.bf16.gmra.mxu0 %v1467
  %v1682 = vpop.f32.mrf.mxu0
  %v1683 = vadd.f32 %v1624, %v1682
  %v1684 = vpop.f32.mrf.mxu0
  %v1685 = vadd.f32 %v1626, %v1684
  %1686 = vmatmul.bf16.gmra.mxu0 %v1470
  %v1687 = vpop.f32.mrf.mxu0
  %v1688 = vadd.f32 %v1629, %v1687
  %v1689 = vpop.f32.mrf.mxu0
  %v1690 = vadd.f32 %v1631, %v1689
  %1691 = vmatmul.bf16.gmra.mxu0 %v1473
  %v1692 = vpop.f32.mrf.mxu0
  %v1693 = vadd.f32 %v1634, %v1692
  %v1694 = vpop.f32.mrf.mxu0
  %v1695 = vadd.f32 %v1636, %v1694
  %1696 = vmatmul.bf16.gmra.mxu0 %v1476
  %v1697 = vpop.f32.mrf.mxu0
  %v1698 = vadd.f32 %v1639, %v1697
  %v1699 = vpop.f32.mrf.mxu0
  %v1700 = vadd.f32 %v1641, %v1699
  %1701 = vmatmul.bf16.gmra.mxu0 %v1479
  %v1702 = vpop.f32.mrf.mxu0
  %v1703 = vadd.f32 %v1644, %v1702
  %v1704 = vpop.f32.mrf.mxu0
  %v1705 = vadd.f32 %v1646, %v1704
  %1706 = vmatmul.bf16.gmra.mxu0 %v1482
  %v1707 = vpop.f32.mrf.mxu0
  %v1708 = vadd.f32 %v1649, %v1707
  %v1709 = vpop.f32.mrf.mxu0
  %v1710 = vadd.f32 %v1651, %v1709
  %1711 = vmatmul.bf16.gmra.mxu0 %v1485
  %v1712 = vpop.f32.mrf.mxu0
  %v1713 = vadd.f32 %v1654, %v1712
  %v1714 = vpop.f32.mrf.mxu0
  %v1715 = vadd.f32 %v1656, %v1714
  %1716 = vmatmul.bf16.gmra.mxu0 %v1488
  %v1717 = vpop.f32.mrf.mxu0
  %v1718 = vadd.f32 %v1659, %v1717
  %v1719 = vpop.f32.mrf.mxu0
  %v1720 = vadd.f32 %v1661, %v1719
  %1721 = vmatmul.bf16.gmra.mxu0 %v1491
  %v1722 = vpop.f32.mrf.mxu0
  %v1723 = vadd.f32 %v1664, %v1722
  %v1724 = vpop.f32.mrf.mxu0
  %v1725 = vadd.f32 %v1666, %v1724
  %1726 = vmatmul.bf16.gmra.mxu0 %v1494
  %v1727 = vpop.f32.mrf.mxu0
  %v1728 = vadd.f32 %v1669, %v1727
  %v1729 = vpop.f32.mrf.mxu0
  %v1730 = vadd.f32 %v1671, %v1729
  %1731 = vdwg.mxu0
  %vm1732 = vcmp.ge.f32.partialorder %v1565, 0.0
  %vm1733 = vcmp.ge.f32.partialorder %v1683, 0.0
  %vm1734 = vcmp.ge.f32.partialorder %v1567, 0.0
  %vm1735 = vcmp.ge.f32.partialorder %v1685, 0.0
  %vm1736 = vcmp.ge.f32.partialorder %v1570, 0.0
  %vm1737 = vcmp.ge.f32.partialorder %v1688, 0.0
  %vm1738 = vcmp.ge.f32.partialorder %v1572, 0.0
  %vm1739 = vcmp.ge.f32.partialorder %v1690, 0.0
  %vm1740 = vcmp.ge.f32.partialorder %v1575, 0.0
  %vm1741 = vcmp.ge.f32.partialorder %v1693, 0.0
  %vm1742 = vcmp.ge.f32.partialorder %v1577, 0.0
  %vm1743 = vcmp.ge.f32.partialorder %v1695, 0.0
  %vm1744 = vcmp.ge.f32.partialorder %v1580, 0.0
  %vm1745 = vcmp.ge.f32.partialorder %v1698, 0.0
  %vm1746 = vcmp.ge.f32.partialorder %v1582, 0.0
  %vm1747 = vcmp.ge.f32.partialorder %v1700, 0.0
  %vm1748 = vcmp.ge.f32.partialorder %v1585, 0.0
  %vm1749 = vcmp.ge.f32.partialorder %v1703, 0.0
  %vm1750 = vcmp.ge.f32.partialorder %v1587, 0.0
  %vm1751 = vcmp.ge.f32.partialorder %v1705, 0.0
  %vm1752 = vcmp.ge.f32.partialorder %v1590, 0.0
  %vm1753 = vcmp.ge.f32.partialorder %v1708, 0.0
  %vm1754 = vcmp.ge.f32.partialorder %v1592, 0.0
  %vm1755 = vcmp.ge.f32.partialorder %v1710, 0.0
  %vm1756 = vcmp.ge.f32.partialorder %v1595, 0.0
  %vm1757 = vcmp.ge.f32.partialorder %v1713, 0.0
  %vm1758 = vcmp.ge.f32.partialorder %v1597, 0.0
  %vm1759 = vcmp.ge.f32.partialorder %v1715, 0.0
  %vm1760 = vcmp.ge.f32.partialorder %v1600, 0.0
  %vm1761 = vcmp.ge.f32.partialorder %v1718, 0.0
  %vm1762 = vcmp.ge.f32.partialorder %v1602, 0.0
  %vm1763 = vcmp.ge.f32.partialorder %v1720, 0.0
  %vm1764 = vcmp.ge.f32.partialorder %v1605, 0.0
  %vm1765 = vcmp.ge.f32.partialorder %v1723, 0.0
  %vm1766 = vcmp.ge.f32.partialorder %v1607, 0.0
  %vm1767 = vcmp.ge.f32.partialorder %v1725, 0.0
  %vm1768 = vcmp.ge.f32.partialorder %v1610, 0.0
  %vm1769 = vcmp.ge.f32.partialorder %v1728, 0.0
  %vm1770 = vcmp.ge.f32.partialorder %v1612, 0.0
  %vm1771 = vcmp.ge.f32.partialorder %v1730, 0.0
  %v1772 = vmul.f32 %v1565, 0.01
  %v1773 = vmul.f32 %v1683, 0.01
  %v1774 = vmul.f32 %v1567, 0.01
  %v1775 = vmul.f32 %v1685, 0.01
  %v1776 = vmul.f32 %v1570, 0.01
  %v1777 = vmul.f32 %v1688, 0.01
  %v1778 = vmul.f32 %v1572, 0.01
  %v1779 = vmul.f32 %v1690, 0.01
  %v1780 = vmul.f32 %v1575, 0.01
  %v1781 = vmul.f32 %v1693, 0.01
  %v1782 = vmul.f32 %v1577, 0.01
  %v1783 = vmul.f32 %v1695, 0.01
  %v1784 = vmul.f32 %v1580, 0.01
  %v1785 = vmul.f32 %v1698, 0.01
  %v1786 = vmul.f32 %v1582, 0.01
  %v1787 = vmul.f32 %v1700, 0.01
  %v1788 = vmul.f32 %v1585, 0.01
  %v1789 = vmul.f32 %v1703, 0.01
  %v1790 = vmul.f32 %v1587, 0.01
  %v1791 = vmul.f32 %v1705, 0.01
  %v1792 = vmul.f32 %v1590, 0.01
  %v1793 = vmul.f32 %v1708, 0.01
  %v1794 = vmul.f32 %v1592, 0.01
  %v1795 = vmul.f32 %v1710, 0.01
  %v1796 = vmul.f32 %v1595, 0.01
  %v1797 = vmul.f32 %v1713, 0.01
  %v1798 = vmul.f32 %v1597, 0.01
  %v1799 = vmul.f32 %v1715, 0.01
  %v1800 = vmul.f32 %v1600, 0.01
  %v1801 = vmul.f32 %v1718, 0.01
  %v1802 = vmul.f32 %v1602, 0.01
  %v1803 = vmul.f32 %v1720, 0.01
  %v1804 = vmul.f32 %v1605, 0.01
  %v1805 = vmul.f32 %v1723, 0.01
  %v1806 = vmul.f32 %v1607, 0.01
  %v1807 = vmul.f32 %v1725, 0.01
  %v1808 = vmul.f32 %v1610, 0.01
  %v1809 = vmul.f32 %v1728, 0.01
  %v1810 = vmul.f32 %v1612, 0.01
  %v1811 = vmul.f32 %v1730, 0.01
  %v1812 = vsel %vm1732, %v1565, %v1772
  %v1813 = vsel %vm1733, %v1683, %v1773
  %v1814 = vsel %vm1734, %v1567, %v1774
  %v1815 = vsel %vm1735, %v1685, %v1775
  %v1816 = vsel %vm1736, %v1570, %v1776
  %v1817 = vsel %vm1737, %v1688, %v1777
  %v1818 = vsel %vm1738, %v1572, %v1778
  %v1819 = vsel %vm1739, %v1690, %v1779
  %v1820 = vsel %vm1740, %v1575, %v1780
  %v1821 = vsel %vm1741, %v1693, %v1781
  %v1822 = vsel %vm1742, %v1577, %v1782
  %v1823 = vsel %vm1743, %v1695, %v1783
  %v1824 = vsel %vm1744, %v1580, %v1784
  %v1825 = vsel %vm1745, %v1698, %v1785
  %v1826 = vsel %vm1746, %v1582, %v1786
  %v1827 = vsel %vm1747, %v1700, %v1787
  %v1828 = vsel %vm1748, %v1585, %v1788
  %v1829 = vsel %vm1749, %v1703, %v1789
  %v1830 = vsel %vm1750, %v1587, %v1790
  %v1831 = vsel %vm1751, %v1705, %v1791
  %v1832 = vsel %vm1752, %v1590, %v1792
  %v1833 = vsel %vm1753, %v1708, %v1793
  %v1834 = vsel %vm1754, %v1592, %v1794
  %v1835 = vsel %vm1755, %v1710, %v1795
  %v1836 = vsel %vm1756, %v1595, %v1796
  %v1837 = vsel %vm1757, %v1713, %v1797
  %v1838 = vsel %vm1758, %v1597, %v1798
  %v1839 = vsel %vm1759, %v1715, %v1799
  %v1840 = vsel %vm1760, %v1600, %v1800
  %v1841 = vsel %vm1761, %v1718, %v1801
  %v1842 = vsel %vm1762, %v1602, %v1802
  %v1843 = vsel %vm1763, %v1720, %v1803
  %v1844 = vsel %vm1764, %v1605, %v1804
  %v1845 = vsel %vm1765, %v1723, %v1805
  %v1846 = vsel %vm1766, %v1607, %v1806
  %v1847 = vsel %vm1767, %v1725, %v1807
  %v1848 = vsel %vm1768, %v1610, %v1808
  %v1849 = vsel %vm1769, %v1728, %v1809
  %v1850 = vsel %vm1770, %v1612, %v1810
  %v1851 = vsel %vm1771, %v1730, %v1811
  %v1852 = vld [vmem:[%s5] sm:$0xff]
  %v1853 = vld [vmem:[%s5 + $0x8] sm:$0xff]
  %v1854 = vld [vmem:[%s5 + $0x10] sm:$0xff]
  %v1855 = vld [vmem:[%s5 + $0x18] sm:$0xff]
  %v1856 = vld [vmem:[%s5 + $0x20] sm:$0xff]
  %v1857 = vld [vmem:[%s5 + $0x28] sm:$0xff]
  %v1858 = vld [vmem:[%s5 + $0x30] sm:$0xff]
  %v1859 = vld [vmem:[%s5 + $0x38] sm:$0xff]
  %v1860 = vld [vmem:[%s5 + $0x40] sm:$0xff]
  %v1861 = vld [vmem:[%s5 + $0x48] sm:$0xff]
  %v1862 = vld [vmem:[%s5 + $0x50] sm:$0xff]
  %v1863 = vld [vmem:[%s5 + $0x58] sm:$0xff]
  %v1864 = vld [vmem:[%s5 + $0x60] sm:$0xff]
  %v1865 = vld [vmem:[%s5 + $0x68] sm:$0xff]
  %v1866 = vpack.c.bf16 %v1814, %v1812
  %v1867 = vpack.c.bf16 %v1815, %v1813
  %v1868 = vpack.c.bf16 %v1818, %v1816
  %v1869 = vpack.c.bf16 %v1819, %v1817
  %v1870 = vpack.c.bf16 %v1822, %v1820
  %v1871 = vpack.c.bf16 %v1823, %v1821
  %v1872 = vpack.c.bf16 %v1826, %v1824
  %v1873 = vpack.c.bf16 %v1827, %v1825
  %v1874 = vpack.c.bf16 %v1830, %v1828
  %v1875 = vpack.c.bf16 %v1831, %v1829
  %v1876 = vpack.c.bf16 %v1834, %v1832
  %v1877 = vpack.c.bf16 %v1835, %v1833
  %v1878 = vpack.c.bf16 %v1838, %v1836
  %v1879 = vpack.c.bf16 %v1839, %v1837
  %v1880 = vpack.c.bf16 %v1842, %v1840
  %v1881 = vpack.c.bf16 %v1843, %v1841
  %v1882 = vpack.c.bf16 %v1846, %v1844
  %v1883 = vpack.c.bf16 %v1847, %v1845
  %v1884 = vpack.c.bf16 %v1850, %v1848
  %v1885 = vpack.c.bf16 %v1851, %v1849
  %1887 = vset.pattern.permute.xlu0 0
  %1888 = vperm.xlu0 %1887, %v158
  %v1889 = vpop.permute.xlu0 %1888
  %1892 = vset.pattern.permute.xlu0 0
  %1893 = vperm.xlu0 %1892, %v159
  %v1894 = vpop.permute.xlu0 %1893
  %1897 = vset.pattern.permute.xlu0 0
  %1898 = vperm.xlu0 %1897, %v160
  %v1899 = vpop.permute.xlu0 %1898
  %1902 = vset.pattern.permute.xlu0 0
  %1903 = vperm.xlu0 %1902, %v161
  %v1904 = vpop.permute.xlu0 %1903
  %1907 = vset.pattern.permute.xlu0 0
  %1908 = vperm.xlu0 %1907, %v162
  %v1909 = vpop.permute.xlu0 %1908
  %1912 = vset.pattern.permute.xlu0 0
  %1913 = vperm.xlu0 %1912, %v163
  %v1914 = vpop.permute.xlu0 %1913
  %1917 = vset.pattern.permute.xlu0 0
  %1918 = vperm.xlu0 %1917, %v164
  %v1919 = vpop.permute.xlu0 %1918
  %1922 = vset.pattern.permute.xlu0 0
  %1923 = vperm.xlu0 %1922, %v165
  %v1924 = vpop.permute.xlu0 %1923
  %1927 = vset.pattern.permute.xlu0 0
  %1928 = vperm.xlu0 %1927, %v166
  %v1929 = vpop.permute.xlu0 %1928
  %1932 = vset.pattern.permute.xlu0 0
  %1933 = vperm.xlu0 %1932, %v167
  %v1934 = vpop.permute.xlu0 %1933
  %1937 = vset.pattern.permute.xlu0 0
  %1938 = vperm.xlu0 %1937, %v168
  %v1939 = vpop.permute.xlu0 %1938
  %1942 = vset.pattern.permute.xlu0 0
  %1943 = vperm.xlu0 %1942, %v169
  %v1944 = vpop.permute.xlu0 %1943
  %1947 = vset.pattern.permute.xlu0 0
  %1948 = vperm.xlu0 %1947, %v170
  %v1949 = vpop.permute.xlu0 %1948
  %1952 = vset.pattern.permute.xlu0 0
  %1953 = vperm.xlu0 %1952, %v171
  %v1954 = vpop.permute.xlu0 %1953
  %v1970 = vunpack.c.l.b16 %v1852
  %v1971 = vunpack.c.h.b16 %v1852
  %v1972 = vunpack.c.l.b16 %v1853
  %v1973 = vunpack.c.h.b16 %v1853
  %v1974 = vunpack.c.l.b16 %v1854
  %v1975 = vunpack.c.h.b16 %v1854
  %v1976 = vunpack.c.l.b16 %v1855
  %v1977 = vunpack.c.h.b16 %v1855
  %v1978 = vunpack.c.l.b16 %v1856
  %v1979 = vunpack.c.h.b16 %v1856
  %v1980 = vunpack.c.l.b16 %v1857
  %v1981 = vunpack.c.h.b16 %v1857
  %v1982 = vunpack.c.l.b16 %v1858
  %v1983 = vunpack.c.h.b16 %v1858
  %v1984 = vunpack.c.l.b16 %v1859
  %v1985 = vunpack.c.h.b16 %v1859
  %v1986 = vunpack.c.l.b16 %v1860
  %v1987 = vunpack.c.h.b16 %v1860
  %v1988 = vunpack.c.l.b16 %v1861
  %v1989 = vunpack.c.h.b16 %v1861
  %v1990 = vunpack.c.l.b16 %v1862
  %v1991 = vunpack.c.h.b16 %v1862
  %v1992 = vunpack.c.l.b16 %v1863
  %v1993 = vunpack.c.h.b16 %v1863
  %v1994 = vunpack.c.l.b16 %v1864
  %v1995 = vunpack.c.h.b16 %v1864
  %v1996 = vunpack.c.l.b16 %v1865
  %v1997 = vunpack.c.h.b16 %v1865
  %v1998 = vpack.c.b16 %v1972, %v1970
  %v1999 = vpack.c.b16 %v1973, %v1971
  %v2000 = vpack.c.b16 %v1976, %v1974
  %v2001 = vpack.c.b16 %v1977, %v1975
  %v2002 = vpack.c.b16 %v1980, %v1978
  %v2003 = vpack.c.b16 %v1981, %v1979
  %v2004 = vpack.c.b16 %v1984, %v1982
  %v2005 = vpack.c.b16 %v1985, %v1983
  %v2006 = vpack.c.b16 %v1988, %v1986
  %v2007 = vpack.c.b16 %v1989, %v1987
  %v2008 = vpack.c.b16 %v1992, %v1990
  %v2009 = vpack.c.b16 %v1993, %v1991
  %v2010 = vpack.c.b16 %v1996, %v1994
  %v2011 = vpack.c.b16 %v1997, %v1995
  %v2020 = vsel %vm849, %v1999, 0
  %v2023 = vsel %vm849, %v2001, 0
  %v2026 = vsel %vm849, %v2003, 0
  %v2029 = vsel %vm849, %v2005, 0
  %v2032 = vsel %vm849, %v2007, 0
  %v2035 = vsel %vm849, %v2009, 0
  %v2038 = vsel %vm849, %v2011, 0
  %2040 = vmatpush.bf16.msra.mxu0 %v1880
  %2041 = vmatpush.bf16.msra.mxu0 %v1878
  %2042 = vmatpush.bf16.msra.mxu0 %v1876
  %2043 = vmatpush.bf16.msra.mxu0 %v1874
  %2044 = vmatpush.bf16.msra.mxu0 %v1872
  %2045 = vmatpush.bf16.msra.mxu0 %v1870
  %2046 = vmatpush.bf16.msra.mxu0 %v1868
  %2047 = vmatpush.bf16.msra.mxu0 %v1866
  %2048 = vmatmul.bf16.gmra.mxu0 %v1998
  %v2049 = vpop.f32.mrf.mxu0
  %v2050 = vadd.f32 %v1889, %v2049
  %v2051 = vpop.f32.mrf.mxu0
  %v2052 = vadd.f32 %v1894, %v2051
  %2053 = vmatmul.bf16.gmra.mxu0 %v2000
  %v2054 = vpop.f32.mrf.mxu0
  %v2055 = vadd.f32 %v1899, %v2054
  %v2056 = vpop.f32.mrf.mxu0
  %v2057 = vadd.f32 %v1904, %v2056
  %2058 = vmatmul.bf16.gmra.mxu0 %v2002
  %v2059 = vpop.f32.mrf.mxu0
  %v2060 = vadd.f32 %v1909, %v2059
  %v2061 = vpop.f32.mrf.mxu0
  %v2062 = vadd.f32 %v1914, %v2061
  %2063 = vmatmul.bf16.gmra.mxu0 %v2004
  %v2064 = vpop.f32.mrf.mxu0
  %v2065 = vadd.f32 %v1919, %v2064
  %v2066 = vpop.f32.mrf.mxu0
  %v2067 = vadd.f32 %v1924, %v2066
  %2068 = vmatmul.bf16.gmra.mxu0 %v2006
  %v2069 = vpop.f32.mrf.mxu0
  %v2070 = vadd.f32 %v1929, %v2069
  %v2071 = vpop.f32.mrf.mxu0
  %v2072 = vadd.f32 %v1934, %v2071
  %2073 = vmatmul.bf16.gmra.mxu0 %v2008
  %v2074 = vpop.f32.mrf.mxu0
  %v2075 = vadd.f32 %v1939, %v2074
  %v2076 = vpop.f32.mrf.mxu0
  %v2077 = vadd.f32 %v1944, %v2076
  %2078 = vmatmul.bf16.gmra.mxu0 %v2010
  %v2079 = vpop.f32.mrf.mxu0
  %v2080 = vadd.f32 %v1949, %v2079
  %v2081 = vpop.f32.mrf.mxu0
  %v2082 = vadd.f32 %v1954, %v2081
  %2083 = vdwg.mxu0
  %2084 = vmatpush.bf16.msra.mxu0 0
  %2085 = vmatpush.bf16.msra.mxu0 0
  %2086 = vmatpush.bf16.msra.mxu0 0
  %2087 = vmatpush.bf16.msra.mxu0 0
  %2088 = vmatpush.bf16.msra.mxu0 0
  %2089 = vmatpush.bf16.msra.mxu0 0
  %2090 = vmatpush.bf16.msra.mxu0 %v1884
  %2091 = vmatpush.bf16.msra.mxu0 %v1882
  %2092 = vmatmul.bf16.gmra.mxu0 %v2020
  %v2093 = vpop.f32.mrf.mxu0
  %v2094 = vadd.f32 %v2050, %v2093
  %v2095 = vpop.f32.mrf.mxu0
  %v2096 = vadd.f32 %v2052, %v2095
  %2097 = vmatmul.bf16.gmra.mxu0 %v2023
  %v2098 = vpop.f32.mrf.mxu0
  %v2099 = vadd.f32 %v2055, %v2098
  %v2100 = vpop.f32.mrf.mxu0
  %v2101 = vadd.f32 %v2057, %v2100
  %2102 = vmatmul.bf16.gmra.mxu0 %v2026
  %v2103 = vpop.f32.mrf.mxu0
  %v2104 = vadd.f32 %v2060, %v2103
  %v2105 = vpop.f32.mrf.mxu0
  %v2106 = vadd.f32 %v2062, %v2105
  %2107 = vmatmul.bf16.gmra.mxu0 %v2029
  %v2108 = vpop.f32.mrf.mxu0
  %v2109 = vadd.f32 %v2065, %v2108
  %v2110 = vpop.f32.mrf.mxu0
  %v2111 = vadd.f32 %v2067, %v2110
  %2112 = vmatmul.bf16.gmra.mxu0 %v2032
  %v2113 = vpop.f32.mrf.mxu0
  %v2114 = vadd.f32 %v2070, %v2113
  %v2115 = vpop.f32.mrf.mxu0
  %v2116 = vadd.f32 %v2072, %v2115
  %2117 = vmatmul.bf16.gmra.mxu0 %v2035
  %v2118 = vpop.f32.mrf.mxu0
  %v2119 = vadd.f32 %v2075, %v2118
  %v2120 = vpop.f32.mrf.mxu0
  %v2121 = vadd.f32 %v2077, %v2120
  %2122 = vmatmul.bf16.gmra.mxu0 %v2038
  %v2123 = vpop.f32.mrf.mxu0
  %v2124 = vadd.f32 %v2080, %v2123
  %v2125 = vpop.f32.mrf.mxu0
  %v2126 = vadd.f32 %v2082, %v2125
  %2127 = vdwg.mxu0
  %2128 = vmatpush.bf16.msra.mxu0 %v1881
  %2129 = vmatpush.bf16.msra.mxu0 %v1879
  %2130 = vmatpush.bf16.msra.mxu0 %v1877
  %2131 = vmatpush.bf16.msra.mxu0 %v1875
  %2132 = vmatpush.bf16.msra.mxu0 %v1873
  %2133 = vmatpush.bf16.msra.mxu0 %v1871
  %2134 = vmatpush.bf16.msra.mxu0 %v1869
  %2135 = vmatpush.bf16.msra.mxu0 %v1867
  %2136 = vmatmul.bf16.gmra.mxu0 %v1998
  %v2137 = vpop.f32.mrf.mxu0
  %v2138 = vadd.f32 %v1889, %v2137
  %v2139 = vpop.f32.mrf.mxu0
  %v2140 = vadd.f32 %v1894, %v2139
  %2141 = vmatmul.bf16.gmra.mxu0 %v2000
  %v2142 = vpop.f32.mrf.mxu0
  %v2143 = vadd.f32 %v1899, %v2142
  %v2144 = vpop.f32.mrf.mxu0
  %v2145 = vadd.f32 %v1904, %v2144
  %2146 = vmatmul.bf16.gmra.mxu0 %v2002
  %v2147 = vpop.f32.mrf.mxu0
  %v2148 = vadd.f32 %v1909, %v2147
  %v2149 = vpop.f32.mrf.mxu0
  %v2150 = vadd.f32 %v1914, %v2149
  %2151 = vmatmul.bf16.gmra.mxu0 %v2004
  %v2152 = vpop.f32.mrf.mxu0
  %v2153 = vadd.f32 %v1919, %v2152
  %v2154 = vpop.f32.mrf.mxu0
  %v2155 = vadd.f32 %v1924, %v2154
  %2156 = vmatmul.bf16.gmra.mxu0 %v2006
  %v2157 = vpop.f32.mrf.mxu0
  %v2158 = vadd.f32 %v1929, %v2157
  %v2159 = vpop.f32.mrf.mxu0
  %v2160 = vadd.f32 %v1934, %v2159
  %2161 = vmatmul.bf16.gmra.mxu0 %v2008
  %v2162 = vpop.f32.mrf.mxu0
  %v2163 = vadd.f32 %v1939, %v2162
  %v2164 = vpop.f32.mrf.mxu0
  %v2165 = vadd.f32 %v1944, %v2164
  %2166 = vmatmul.bf16.gmra.mxu0 %v2010
  %v2167 = vpop.f32.mrf.mxu0
  %v2168 = vadd.f32 %v1949, %v2167
  %v2169 = vpop.f32.mrf.mxu0
  %v2170 = vadd.f32 %v1954, %v2169
  %2171 = vdwg.mxu0
  %2172 = vmatpush.bf16.msra.mxu0 0
  %2173 = vmatpush.bf16.msra.mxu0 0
  %2174 = vmatpush.bf16.msra.mxu0 0
  %2175 = vmatpush.bf16.msra.mxu0 0
  %2176 = vmatpush.bf16.msra.mxu0 0
  %2177 = vmatpush.bf16.msra.mxu0 0
  %2178 = vmatpush.bf16.msra.mxu0 %v1885
  %2179 = vmatpush.bf16.msra.mxu0 %v1883
  %2180 = vmatmul.bf16.gmra.mxu0 %v2020
  %v2181 = vpop.f32.mrf.mxu0
  %v2182 = vadd.f32 %v2138, %v2181
  %v2183 = vpop.f32.mrf.mxu0
  %v2184 = vadd.f32 %v2140, %v2183
  %2185 = vmatmul.bf16.gmra.mxu0 %v2023
  %v2186 = vpop.f32.mrf.mxu0
  %v2187 = vadd.f32 %v2143, %v2186
  %v2188 = vpop.f32.mrf.mxu0
  %v2189 = vadd.f32 %v2145, %v2188
  %2190 = vmatmul.bf16.gmra.mxu0 %v2026
  %v2191 = vpop.f32.mrf.mxu0
  %v2192 = vadd.f32 %v2148, %v2191
  %v2193 = vpop.f32.mrf.mxu0
  %v2194 = vadd.f32 %v2150, %v2193
  %2195 = vmatmul.bf16.gmra.mxu0 %v2029
  %v2196 = vpop.f32.mrf.mxu0
  %v2197 = vadd.f32 %v2153, %v2196
  %v2198 = vpop.f32.mrf.mxu0
  %v2199 = vadd.f32 %v2155, %v2198
  %2200 = vmatmul.bf16.gmra.mxu0 %v2032
  %v2201 = vpop.f32.mrf.mxu0
  %v2202 = vadd.f32 %v2158, %v2201
  %v2203 = vpop.f32.mrf.mxu0
  %v2204 = vadd.f32 %v2160, %v2203
  %2205 = vmatmul.bf16.gmra.mxu0 %v2035
  %v2206 = vpop.f32.mrf.mxu0
  %v2207 = vadd.f32 %v2163, %v2206
  %v2208 = vpop.f32.mrf.mxu0
  %v2209 = vadd.f32 %v2165, %v2208
  %2210 = vmatmul.bf16.gmra.mxu0 %v2038
  %v2211 = vpop.f32.mrf.mxu0
  %v2212 = vadd.f32 %v2168, %v2211
  %v2213 = vpop.f32.mrf.mxu0
  %v2214 = vadd.f32 %v2170, %v2213
  %2215 = vdwg.mxu0
  %v2216 = vtanh.pop %v2124
  %v2217 = vtanh.pop %v2212
  %v2218 = vtanh.pop %v2126
  %v2219 = vtanh.pop %v2214
  %v2220 = vsub.f32 %v27, %v2216
  %v2221 = vsub.f32 %v28, %v2217
  %v2222 = vsub.f32 %v29, %v2218
  %v2223 = vsub.f32 %v30, %v2219
  %v2224 = vmul.f32 %v2220, %v2220
  %v2225 = vmul.f32 %v2221, %v2221
  %v2226 = vmul.f32 %v2222, %v2222
  %v2227 = vmul.f32 %v2223, %v2223
  %v2228 = vadd.f32 %v2224, %v2225
  %v2229 = vadd.f32 %v2228, %v2226
  %v2230 = vadd.f32 %v2229, %v2227
  %2231 = vadd.xlane.f32.xlu0 %v2230
  %v2232 = vpop.xlane.xlu0 %2231
  %v2233 = vrot.slane %v2232, 4
  %v2234 = vadd.f32 %v2232, %v2233
  %v2235 = vrot.slane %v2234, 2
  %v2236 = vadd.f32 %v2234, %v2235
  %v2237 = vrot.slane %v2236, 1
  %v2238 = vadd.f32 %v2236, %v2237
  %s2239 = vtos %v2238
  %s2240 = smul.f32 %s2239, -0.5
  %s2241 = ssub.f32 %s2240, 3763.9722
  %v2242 = vmul.f32 %v43, %v43
  %v2243 = vmul.f32 %v44, %v44
  %v2244 = vmul.f32 %v45, %v45
  %v2245 = vmul.f32 %v46, %v46
  %v2246 = vmul.f32 %v60, %v60
  %v2247 = vmul.f32 %v61, %v61
  %v2248 = vmul.f32 %v62, %v62
  %v2249 = vmul.f32 %v63, %v63
  %v2250 = vmul.f32 %v77, %v77
  %v2251 = vmul.f32 %v78, %v78
  %v2252 = vmul.f32 %v79, %v79
  %v2253 = vmul.f32 %v80, %v80
  %v2254 = vadd.f32 %v2242, %v2243
  %v2255 = vadd.f32 %v2254, %v2244
  %v2256 = vadd.f32 %v2255, %v2245
  %v2257 = vadd.f32 %v2256, %v2246
  %v2258 = vadd.f32 %v2257, %v2247
  %v2259 = vadd.f32 %v2258, %v2248
  %v2260 = vadd.f32 %v2259, %v2249
  %v2261 = vadd.f32 %v2260, %v2250
  %v2262 = vadd.f32 %v2261, %v2251
  %v2263 = vadd.f32 %v2262, %v2252
  %v2264 = vadd.f32 %v2263, %v2253
  %2265 = vadd.xlane.f32.xlu0 %v2264
  %v2266 = vpop.xlane.xlu0 %2265
  %v2267 = vrot.slane %v2266, 4
  %v2268 = vadd.f32 %v2266, %v2267
  %v2269 = vrot.slane %v2268, 2
  %v2270 = vadd.f32 %v2268, %v2269
  %v2271 = vrot.slane %v2270, 1
  %v2272 = vadd.f32 %v2270, %v2271
  %s2273 = vtos %v2272
  %s2274 = smul.f32 %s2273, -0.0012562893
  %s2275 = ssub.f32 %s2274, -17002.25
  %v2276 = vsub.f32 %v43, %v2094
  %v2277 = vsub.f32 %v44, %v2182
  %v2278 = vsub.f32 %v45, %v2096
  %v2279 = vsub.f32 %v46, %v2184
  %v2280 = vsub.f32 %v60, %v2099
  %v2281 = vsub.f32 %v61, %v2187
  %v2282 = vsub.f32 %v62, %v2101
  %v2283 = vsub.f32 %v63, %v2189
  %v2284 = vsub.f32 %v77, %v2104
  %v2285 = vsub.f32 %v78, %v2192
  %v2286 = vsub.f32 %v79, %v2106
  %v2287 = vsub.f32 %v80, %v2194
  %v2288 = vmul.f32 %v2276, %v2276
  %v2289 = vmul.f32 %v2277, %v2277
  %v2290 = vmul.f32 %v2278, %v2278
  %v2291 = vmul.f32 %v2279, %v2279
  %v2292 = vmul.f32 %v2280, %v2280
  %v2293 = vmul.f32 %v2281, %v2281
  %v2294 = vmul.f32 %v2282, %v2282
  %v2295 = vmul.f32 %v2283, %v2283
  %v2296 = vmul.f32 %v2284, %v2284
  %v2297 = vmul.f32 %v2285, %v2285
  %v2298 = vmul.f32 %v2286, %v2286
  %v2299 = vmul.f32 %v2287, %v2287
  %v2300 = vmul.f32 %v2288, -0.5
  %v2301 = vmul.f32 %v2289, -0.5
  %v2302 = vmul.f32 %v2290, -0.5
  %v2303 = vmul.f32 %v2291, -0.5
  %v2304 = vmul.f32 %v2292, -0.5
  %v2305 = vmul.f32 %v2293, -0.5
  %v2306 = vmul.f32 %v2294, -0.5
  %v2307 = vmul.f32 %v2295, -0.5
  %v2308 = vmul.f32 %v2296, -0.5
  %v2309 = vmul.f32 %v2297, -0.5
  %v2310 = vmul.f32 %v2298, -0.5
  %v2311 = vmul.f32 %v2299, -0.5
  %v2312 = vsub.f32 0.0, %v2109
  %v2313 = vsub.f32 0.0, %v2197
  %v2314 = vsub.f32 0.0, %v2111
  %v2315 = vsub.f32 0.0, %v2199
  %v2316 = vsub.f32 0.0, %v2114
  %v2317 = vsub.f32 0.0, %v2202
  %v2318 = vsub.f32 0.0, %v2116
  %v2319 = vsub.f32 0.0, %v2204
  %v2320 = vsub.f32 0.0, %v2119
  %v2321 = vsub.f32 0.0, %v2207
  %v2322 = vsub.f32 0.0, %v2121
  %v2323 = vsub.f32 0.0, %v2209
  %v2324 = vmul.f32 %v2312, 1.442695
  %v2325 = vpow.pop %v2324
  %v2326 = vmul.f32 %v2313, 1.442695
  %v2327 = vpow.pop %v2326
  %v2328 = vmul.f32 %v2314, 1.442695
  %v2329 = vpow.pop %v2328
  %v2330 = vmul.f32 %v2315, 1.442695
  %v2331 = vpow.pop %v2330
  %v2332 = vmul.f32 %v2316, 1.442695
  %v2333 = vpow.pop %v2332
  %v2334 = vmul.f32 %v2317, 1.442695
  %v2335 = vpow.pop %v2334
  %v2336 = vmul.f32 %v2318, 1.442695
  %v2337 = vpow.pop %v2336
  %v2338 = vmul.f32 %v2319, 1.442695
  %v2339 = vpow.pop %v2338
  %v2340 = vmul.f32 %v2320, 1.442695
  %v2341 = vpow.pop %v2340
  %v2342 = vmul.f32 %v2321, 1.442695
  %v2343 = vpow.pop %v2342
  %v2344 = vmul.f32 %v2322, 1.442695
  %v2345 = vpow.pop %v2344
  %v2346 = vmul.f32 %v2323, 1.442695
  %v2347 = vpow.pop %v2346
  %v2348 = vmul.f32 %v2300, %v2325
  %v2349 = vmul.f32 %v2301, %v2327
  %v2350 = vmul.f32 %v2302, %v2329
  %v2351 = vmul.f32 %v2303, %v2331
  %v2352 = vmul.f32 %v2304, %v2333
  %v2353 = vmul.f32 %v2305, %v2335
  %v2354 = vmul.f32 %v2306, %v2337
  %v2355 = vmul.f32 %v2307, %v2339
  %v2356 = vmul.f32 %v2308, %v2341
  %v2357 = vmul.f32 %v2309, %v2343
  %v2358 = vmul.f32 %v2310, %v2345
  %v2359 = vmul.f32 %v2311, %v2347
  %v2360 = vmul.f32 %v2109, 0.5
  %v2361 = vmul.f32 %v2197, 0.5
  %v2362 = vmul.f32 %v2111, 0.5
  %v2363 = vmul.f32 %v2199, 0.5
  %v2364 = vmul.f32 %v2114, 0.5
  %v2365 = vmul.f32 %v2202, 0.5
  %v2366 = vmul.f32 %v2116, 0.5
  %v2367 = vmul.f32 %v2204, 0.5
  %v2368 = vmul.f32 %v2119, 0.5
  %v2369 = vmul.f32 %v2207, 0.5
  %v2370 = vmul.f32 %v2121, 0.5
  %v2371 = vmul.f32 %v2209, 0.5
  %v2372 = vsub.f32 %v2348, %v2360
  %v2373 = vsub.f32 %v2349, %v2361
  %v2374 = vsub.f32 %v2350, %v2362
  %v2375 = vsub.f32 %v2351, %v2363
  %v2376 = vsub.f32 %v2352, %v2364
  %v2377 = vsub.f32 %v2353, %v2365
  %v2378 = vsub.f32 %v2354, %v2366
  %v2379 = vsub.f32 %v2355, %v2367
  %v2380 = vsub.f32 %v2356, %v2368
  %v2381 = vsub.f32 %v2357, %v2369
  %v2382 = vsub.f32 %v2358, %v2370
  %v2383 = vsub.f32 %v2359, %v2371
  %v2384 = vadd.f32 %v2372, %v2373
  %v2385 = vadd.f32 %v2384, %v2374
  %v2386 = vadd.f32 %v2385, %v2375
  %v2387 = vadd.f32 %v2386, %v2376
  %v2388 = vadd.f32 %v2387, %v2377
  %v2389 = vadd.f32 %v2388, %v2378
  %v2390 = vadd.f32 %v2389, %v2379
  %v2391 = vadd.f32 %v2390, %v2380
  %v2392 = vadd.f32 %v2391, %v2381
  %v2393 = vadd.f32 %v2392, %v2382
  %v2394 = vadd.f32 %v2393, %v2383
  %2395 = vadd.xlane.f32.xlu0 %v2394
  %v2396 = vpop.xlane.xlu0 %2395
  %v2397 = vrot.slane %v2396, 4
  %v2398 = vadd.f32 %v2396, %v2397
  %v2399 = vrot.slane %v2398, 2
  %v2400 = vadd.f32 %v2398, %v2399
  %v2401 = vrot.slane %v2400, 1
  %v2402 = vadd.f32 %v2400, %v2401
  %s2403 = vtos %v2402
  %s2404 = ssub.f32 %s2403, 11291.916
  %v2405 = vmul.f32 %v94, %v94
  %v2406 = vmul.f32 %v95, %v95
  %v2407 = vmul.f32 %v96, %v96
  %v2408 = vmul.f32 %v97, %v97
  %v2409 = vadd.f32 %v2405, %v2406
  %v2410 = vadd.f32 %v2409, %v2407
  %v2411 = vadd.f32 %v2410, %v2408
  %2412 = vadd.xlane.f32.xlu0 %v2411
  %v2413 = vpop.xlane.xlu0 %2412
  %v2414 = vrot.slane %v2413, 4
  %v2415 = vadd.f32 %v2413, %v2414
  %v2416 = vrot.slane %v2415, 2
  %v2417 = vadd.f32 %v2415, %v2416
  %v2418 = vrot.slane %v2417, 1
  %v2419 = vadd.f32 %v2417, %v2418
  %s2420 = vtos %v2419
  %s2421 = smul.f32 %s2420, -0.0012562893
  %s2422 = ssub.f32 %s2421, -5667.4165
  %s2423 = smul.f32 %s2420, -0.5
  %s2424 = ssub.f32 %s2423, 3763.9722
  %s2425 = ssub.f32 %s2275, %s2404
  %s2426 = ssub.f32 %s2422, %s2424
  %s2427 = sadd.f32 %s2425, %s2426
  %s2428 = ssub.f32 %s2241, %s2427
  %v2429 = vlaneseq
  %v2430 = vshrl.u32 %v2429, 7
  %vm2431 = vcmp.eq.s32.totalorder %v2430, 0
  %vm2432 = vcmp.eq.s32.totalorder %v2430, 1
  %v2433 = vstv %s2241
  %v2434 = vsel %vm2432, %v2433, 0.0
  %v2435 = vstv %s2428
  %v2436 = vsel %vm2431, %v2435, %v2434
  %2437 = vst [vmem:[%s7] sm:$0xff] %v2436
  // Predicated region
  $region30: #{ddpm_forward.1} parent=0 // pred_check
    _
  $region31: #{ddpm_forward.1} parent=0 // pred_check_branch
    %2439 = sbr.rel (0) target = $region33
  $region32: #{ddpm_forward.1} parent=0 // pred_region
    _
  $region33: #{ddpm_forward.1} parent=0 // pred_fallthru
    _
  // Predicated region
  $region34: #{ddpm_forward.1} parent=0 // pred_check
    _
  $region35: #{ddpm_forward.1} parent=0 // pred_check_branch
    %2441 = sbr.rel (0) target = $region37
  $region36: #{ddpm_forward.1} parent=0 // pred_region
    _
  $region37: #{ddpm_forward.1} parent=0 // pred_fallthru
    _

</llo_original>
